<compile_context>
chip_gen: v6e
topology: v6e:2x2x1
jax: 0.10.0
libtpu: 0.0.40
codegen_flags: <defaults>
</compile_context>

<pallas_src>
import functools

import jax
import jax.numpy as jnp
from jax.experimental import pallas as pl
from jax.experimental.pallas import tpu as pltpu


# ----------------------------------------------------------------------------
# Small helpers
# ----------------------------------------------------------------------------
def _round_up(x, m):
    return ((x + m - 1) // m) * m


def _pad_to(a, shape):
    pads = [(0, t - s) for s, t in zip(a.shape, shape)]
    return jnp.pad(a, pads)


def _pick_b_tile(n, seq_len, target_rows=256):
    """Largest divisor of n such that b_tile*seq_len <= target_rows while keeping
    at least 2 grid steps (so both v7x TensorCores get work)."""
    best = 1
    for bt in range(1, n + 1):
        if n % bt:
            continue
        if n >= 2 and n // bt < 2:
            continue
        if bt * seq_len <= max(target_rows, seq_len):
            best = bt
    return best


# ----------------------------------------------------------------------------
# Fused Pallas kernel: all TemporalBlocks + head, B_TILE samples per grid step
# ----------------------------------------------------------------------------
def _fused_tcn_kernel(*refs, layer_cfgs, ksize, seq_len, offset, b_tile,
                      c_in, out_valid):
    it = iter(refs)
    x_ref = next(it)
    layer_refs = []
    for (_dil, has_ds) in layer_cfgs:
        n = 6 if has_ds else 4
        layer_refs.append(tuple(next(it) for _ in range(n)))
    wlin_ref = next(it)
    blin_ref = next(it)
    o_ref = next(it)
    buf_a = next(it)
    buf_b = next(it)

    L = seq_len
    cpad = buf_a.shape[2]
    M = b_tile * L

    # ---- stage the input: zero halo rows + padded lanes once, masked-store the
    # real channels, then read the lane-padded activation back as ONE value.
    buf_a[...] = jnp.zeros_like(buf_a)
    if offset > 0:
        buf_b[:, pl.ds(0, offset), :] = jnp.zeros((b_tile, offset, cpad),
                                                  jnp.float32)
    buf_a[:, pl.ds(offset, L), pl.ds(0, c_in)] = x_ref[...].astype(jnp.float32)
    x = buf_a[:, pl.ds(offset, L), :].reshape(M, cpad)          # (M, CPAD) f32

    def causal_conv(src_ref, cur_bf16, w_ref, b_ref, dilation):
        # K causally shifted taps: the shift-0 tap is the live value; shifted
        # taps are static slices of the halo-padded scratch.  Lane-concat and
        # contract against the (K*CPAD, CPAD) bf16 weight in ONE MXU dot
        # (256-deep contraction maps natively to the v6e/v7x MXU).
        taps = []
        for k in range(ksize):
            shift = (ksize - 1 - k) * dilation
            if shift == 0:
                taps.append(cur_bf16)
            else:
                t = src_ref[:, pl.ds(offset - shift, L), :]
                taps.append(t.reshape(M, cpad).astype(jnp.bfloat16))
        vk = taps[0] if len(taps) == 1 else jnp.concatenate(taps, axis=1)
        return jnp.dot(vk, w_ref[...],
                       preferred_element_type=jnp.float32) + b_ref[...]

    n_layers = len(layer_cfgs)
    for li, ((dilation, has_ds), lrefs) in enumerate(zip(layer_cfgs,
                                                         layer_refs)):
        if has_ds:
            w1, b1, w2, b2, wd, bd = lrefs
        else:
            w1, b1, w2, b2 = lrefs
        x_bf = x.astype(jnp.bfloat16)
        h = jnp.maximum(causal_conv(buf_a, x_bf, w1, b1, dilation), 0.0)
        if ksize > 1:                      # only shifted taps need the halo
            buf_b[:, pl.ds(offset, L), :] = h.reshape(b_tile, L, cpad)
        g = jnp.maximum(causal_conv(buf_b, h.astype(jnp.bfloat16), w2, b2,
                                    dilation), 0.0)
        if has_ds:
            res = jnp.dot(x_bf, wd[...],
                          preferred_element_type=jnp.float32) + bd[...]
        else:
            res = x
        x = jnp.maximum(g + res, 0.0)
        if ksize > 1 and li + 1 < n_layers:
            buf_a[:, pl.ds(offset, L), :] = x.reshape(b_tile, L, cpad)

    # ---- fused head: last-timestep gather (one-hot matmul on the MXU, no
    # sublane gather), linear, masked log_softmax ------------------------------
    col = jax.lax.broadcasted_iota(jnp.int32, (b_tile, M), 1)
    tgt = jax.lax.broadcasted_iota(jnp.int32, (b_tile, M), 0) * L + (L - 1)
    sel = (col == tgt).astype(jnp.bfloat16)
    y_last = jnp.dot(sel, x.astype(jnp.bfloat16),
                     preferred_element_type=jnp.float32)        # (B_TILE, CPAD)
    logits = jnp.dot(y_last.astype(jnp.bfloat16), wlin_ref[...],
                     preferred_element_type=jnp.float32) + blin_ref[...]
    lane = jax.lax.broadcasted_iota(jnp.int32, logits.shape, 1)
    logits = jnp.where(lane < out_valid, logits, -1e30)   # ignore padded lanes
    m = jnp.max(logits, axis=1, keepdims=True)
    z = logits - m
    lse = jnp.log(jnp.sum(jnp.exp(z), axis=1, keepdims=True))
    o_ref[0] = (z - lse).astype(o_ref.dtype)


# ----------------------------------------------------------------------------
# One-time parameter preparation (padding + bf16 cast outside the call path)
# ----------------------------------------------------------------------------
def prepare_params(params, kernel_size):
    blocks = params["blocks"]
    c_in = int(blocks[0]["w1"].shape[1])
    chans = [c_in] + [int(b["w1"].shape[2]) for b in blocks]
    cpad = _round_up(max(chans), 128)
    out_size = int(params["w_lin"].shape[1])
    opad = _round_up(out_size, 128)
    maxpad = max((kernel_size - 1) * int(b["dilation"]) for b in blocks)
    offset = _round_up(maxpad, 8) if maxpad > 0 else 0

    layer_args, layer_cfgs = [], []
    for blk in blocks:
        K = int(blk["w1"].shape[0])
        assert K == kernel_size
        # (K, Cin, Cout) -> zero-pad -> lane-stacked (K*CPAD, CPAD) bf16 weight.
        args = [
            _pad_to(blk["w1"], (K, cpad, cpad)).reshape(K * cpad, cpad)
            .astype(jnp.bfloat16),
            _pad_to(blk["b1"], (1, cpad)).astype(jnp.float32),
            _pad_to(blk["w2"], (K, cpad, cpad)).reshape(K * cpad, cpad)
            .astype(jnp.bfloat16),
            _pad_to(blk["b2"], (1, cpad)).astype(jnp.float32),
        ]
        if blk["has_downsample"]:
            args.append(_pad_to(blk["wd"], (cpad, cpad)).astype(jnp.bfloat16))
            args.append(_pad_to(blk["bd"], (1, cpad)).astype(jnp.float32))
        layer_args.append(args)
        layer_cfgs.append((int(blk["dilation"]), bool(blk["has_downsample"])))

    return dict(
        layer_args=layer_args, layer_cfgs=tuple(layer_cfgs),
        w_lin=_pad_to(params["w_lin"], (cpad, opad)).astype(jnp.bfloat16),
        b_lin=_pad_to(params["b_lin"], (1, opad)).astype(jnp.float32),
        c_in=c_in, cpad=cpad, out_size=out_size, opad=opad, offset=offset,
        kernel_size=kernel_size)


# ----------------------------------------------------------------------------
# Wrapper: batch-tile the grid and launch the fused kernel
# ----------------------------------------------------------------------------
def tcn_forward(x_ncl, prep):
    """x_ncl: (N, C_in, L) as in PyTorch.  Returns log-probs (N, output_size)."""
    N, c_in, L = x_ncl.shape
    assert c_in == prep["c_in"]
    cpad, opad, offset = prep["cpad"], prep["opad"], prep["offset"]
    ksize = prep["kernel_size"]
    layer_cfgs = prep["layer_cfgs"]

    b_tile = _pick_b_tile(N, L)          # demo: 8 -> M = 128 rows, grid = 2
    grid = N // b_tile
    M = b_tile * L

    # NCL -> NLC (channels on the lane axis).  NOT lane-padded: the
    # (b_tile, L, C_in) block is DMA'd as-is and padded inside VMEM.
    x = jnp.transpose(x_ncl, (0, 2, 1)).astype(jnp.float32)

    weight_mode = pl.Buffered(1)   # constant across the grid -> single buffer
    args = [x]
    in_specs = [pl.BlockSpec((b_tile, L, c_in), lambda n: (n, 0, 0))]
    flops = 0
    for (dilation, has_ds), largs in zip(layer_cfgs, prep["layer_args"]):
        for a in largs:
            in_specs.append(pl.BlockSpec(a.shape,
                                         lambda n, nd=a.ndim: (0,) * nd,
                                         pipeline_mode=weight_mode))
        args += largs
        flops += 2 * 2 * L * (ksize * cpad) * cpad        # conv1 + conv2
        if has_ds:
            flops += 2 * L * cpad * cpad
    args += [prep["w_lin"], prep["b_lin"]]
    in_specs += [pl.BlockSpec(prep["w_lin"].shape, lambda n: (0, 0),
                              pipeline_mode=weight_mode),
                 pl.BlockSpec(prep["b_lin"].shape, lambda n: (0, 0),
                              pipeline_mode=weight_mode)]
    flops = (flops + 2 * cpad * opad) * N

    weight_bytes = sum(int(a.size) * a.dtype.itemsize for a in args[1:])
    scratch_bytes = 2 * b_tile * (offset + L) * cpad * 4
    io_bytes = 2 * b_tile * L * c_in * 4 + 2 * b_tile * opad * 4
    temp_bytes = 8 * M * max(ksize, 1) * cpad * 4
    vmem_limit = min(128 * 1024 * 1024,
                     max(2 * weight_bytes + scratch_bytes + io_bytes
                         + temp_bytes + (8 << 20), 16 << 20))

    kern = functools.partial(
        _fused_tcn_kernel,
        layer_cfgs=layer_cfgs, ksize=ksize, seq_len=L, offset=offset,
        b_tile=b_tile, c_in=c_in, out_valid=prep["out_size"])

    out = pl.pallas_call(
        kern,
        out_shape=jax.ShapeDtypeStruct((grid, b_tile, opad), jnp.float32),
        grid=(grid,),
        in_specs=in_specs,
        out_specs=pl.BlockSpec((1, b_tile, opad), lambda n: (n, 0, 0)),
        scratch_shapes=[pltpu.VMEM((b_tile, offset + L, cpad), jnp.float32),
                        pltpu.VMEM((b_tile, offset + L, cpad), jnp.float32)],
        compiler_params=pltpu.CompilerParams(
            dimension_semantics=("parallel",),
            vmem_limit_bytes=int(vmem_limit)),
        cost_estimate=pl.CostEstimate(
            flops=int(flops),
            transcendentals=int(N * opad),
            bytes_accessed=int(x.size * 4 + weight_bytes + N * opad * 4)),
    )(*args)
    return out.reshape(N, opad)[:, :prep["out_size"]]


# ----------------------------------------------------------------------------
# Deterministic parameter construction (synthetic; no checkpoint loading)
# ----------------------------------------------------------------------------
def make_params(key, input_size, output_size, num_channels, kernel_size):
    blocks = []
    k_iter = key
    for i, c_out in enumerate(num_channels):
        c_in = input_size if i == 0 else num_channels[i - 1]
        dilation = 2 ** i
        k_iter, k1, k2, k3, k4, k5, k6 = jax.random.split(k_iter, 7)
        blk = dict(
            # conv weights stored as (K, C_in, C_out) for lane-major matmuls
            w1=0.1 * jax.random.normal(k1, (kernel_size, c_in, c_out), jnp.float32),
            b1=0.1 * jax.random.normal(k2, (1, c_out), jnp.float32),
            w2=0.1 * jax.random.normal(k3, (kernel_size, c_out, c_out), jnp.float32),
            b2=0.1 * jax.random.normal(k4, (1, c_out), jnp.float32),
            dilation=dilation,
            has_downsample=(c_in != c_out),
        )
        if blk["has_downsample"]:
            blk["wd"] = 0.1 * jax.random.normal(k5, (c_in, c_out), jnp.float32)
            blk["bd"] = 0.1 * jax.random.normal(k6, (1, c_out), jnp.float32)
        blocks.append(blk)
    k_iter, kw, kb = jax.random.split(k_iter, 3)
    w_lin = 0.1 * jax.random.normal(kw, (num_channels[-1], output_size), jnp.float32)
    b_lin = 0.1 * jax.random.normal(kb, (1, output_size), jnp.float32)
    return dict(blocks=blocks, w_lin=w_lin, b_lin=b_lin)


# ----------------------------------------------------------------------------
# Pure-JAX reference (f32, for the correctness check)
# ----------------------------------------------------------------------------
def _ref_shift(a, s):
    if s == 0:
        return a
    return jnp.concatenate([jnp.zeros_like(a[:, :s]), a[:, :-s]], axis=1)


def ref_forward(x_ncl, params, kernel_size):
    x = jnp.transpose(x_ncl, (0, 2, 1)).astype(jnp.float32)
    for blk in params["blocks"]:
        d = blk["dilation"]
        h = sum(_ref_shift(x, (kernel_size - 1 - k) * d) @ blk["w1"][k]
                for k in range(kernel_size)) + blk["b1"]
        h = jnp.maximum(h, 0.0)
        g = sum(_ref_shift(h, (kernel_size - 1 - k) * d) @ blk["w2"][k]
                for k in range(kernel_size)) + blk["b2"]
        g = jnp.maximum(g, 0.0)
        res = x @ blk["wd"] + blk["bd"] if blk["has_downsample"] else x
        x = jnp.maximum(g + res, 0.0)
    logits = x[:, -1, :] @ params["w_lin"] + params["b_lin"]
    return jax.nn.log_softmax(logits, axis=1)


# ----------------------------------------------------------------------------
if __name__ == "__main__":
    key = jax.random.PRNGKey(0)
    # L kept a multiple of 8 so in-kernel (B_TILE, L, CPAD) <-> (B_TILE*L, CPAD)
    # reshapes stay layout-free; N sized so B_TILE=8 (M=128 rows) and grid=2.
    N, C_in, L = 16, 4, 16
    num_channels = [8, 8]
    kernel_size = 2
    output_size = 5

    k_x, k_p = jax.random.split(key)
    x = jax.random.normal(k_x, (N, C_in, L), jnp.float32)  # PyTorch (N, C_in, L_in)
    params = make_params(k_p, C_in, output_size, num_channels, kernel_size)

    prep = prepare_params(params, kernel_size)
    out = tcn_forward(x, prep)
    out = jax.block_until_ready(out)

    ref = ref_forward(x, params, kernel_size)
    assert out.shape == (N, output_size)
    # bf16 MXU operands vs f32 reference -> loosened tolerance (review note).
    max_err = float(jnp.max(jnp.abs(out - ref)))
    assert max_err < 5e-2, f"max abs err {max_err}"

    print("KERNEL_OK")
</pallas_src>

<mosaic_0001>
module attributes {stable_mosaic.version = 11 : i64} {
  func.func @_fused_tcn_kernel(%arg0: i32, %arg1: memref<8x16x4xf32, #tpu.memory_space<vmem>>, %arg2: memref<256x128xbf16, #tpu.memory_space<vmem>>, %arg3: memref<1x128xf32, #tpu.memory_space<vmem>>, %arg4: memref<256x128xbf16, #tpu.memory_space<vmem>>, %arg5: memref<1x128xf32, #tpu.memory_space<vmem>>, %arg6: memref<128x128xbf16, #tpu.memory_space<vmem>>, %arg7: memref<1x128xf32, #tpu.memory_space<vmem>>, %arg8: memref<256x128xbf16, #tpu.memory_space<vmem>>, %arg9: memref<1x128xf32, #tpu.memory_space<vmem>>, %arg10: memref<256x128xbf16, #tpu.memory_space<vmem>>, %arg11: memref<1x128xf32, #tpu.memory_space<vmem>>, %arg12: memref<128x128xbf16, #tpu.memory_space<vmem>>, %arg13: memref<1x128xf32, #tpu.memory_space<vmem>>, %arg14: memref<1x8x128xf32, #tpu.memory_space<vmem>>, %arg15: memref<8x24x128xf32, #tpu.memory_space<vmem>>, %arg16: memref<8x24x128xf32, #tpu.memory_space<vmem>>) attributes {dimension_semantics = [#tpu.dimension_semantics<parallel>], iteration_bounds = array<i64: 2>, scalar_prefetch = 0 : i64, scratch_operands = 2 : i64, tpu.core_type = #tpu.core_type<tc>, window_params = [{transform_indices = @transform_0, window_bounds = array<i64: 8, 16, 4>}, {pipeline_mode = #tpu.pipeline_mode<synchronous>, transform_indices = @transform_1, window_bounds = array<i64: 256, 128>}, {pipeline_mode = #tpu.pipeline_mode<synchronous>, transform_indices = @transform_2, window_bounds = array<i64: 1, 128>}, {pipeline_mode = #tpu.pipeline_mode<synchronous>, transform_indices = @transform_3, window_bounds = array<i64: 256, 128>}, {pipeline_mode = #tpu.pipeline_mode<synchronous>, transform_indices = @transform_4, window_bounds = array<i64: 1, 128>}, {pipeline_mode = #tpu.pipeline_mode<synchronous>, transform_indices = @transform_5, window_bounds = array<i64: 128, 128>}, {pipeline_mode = #tpu.pipeline_mode<synchronous>, transform_indices = @transform_6, window_bounds = array<i64: 1, 128>}, {pipeline_mode = #tpu.pipeline_mode<synchronous>, transform_indices = @transform_7, window_bounds = array<i64: 256, 128>}, {pipeline_mode = #tpu.pipeline_mode<synchronous>, transform_indices = @transform_8, window_bounds = array<i64: 1, 128>}, {pipeline_mode = #tpu.pipeline_mode<synchronous>, transform_indices = @transform_9, window_bounds = array<i64: 256, 128>}, {pipeline_mode = #tpu.pipeline_mode<synchronous>, transform_indices = @transform_10, window_bounds = array<i64: 1, 128>}, {pipeline_mode = #tpu.pipeline_mode<synchronous>, transform_indices = @transform_11, window_bounds = array<i64: 128, 128>}, {pipeline_mode = #tpu.pipeline_mode<synchronous>, transform_indices = @transform_12, window_bounds = array<i64: 1, 128>}, {transform_indices = @transform_13, window_bounds = array<i64: 1, 8, 128>}]} {
    %cst = arith.constant 0.000000e+00 : f32
    %0 = vector.broadcast %cst : f32 to vector<8x24x128xf32>
    %c0 = arith.constant 0 : index
    %c0_0 = arith.constant 0 : index
    %c0_1 = arith.constant 0 : index
    %1 = vector.load %arg15[%c0, %c0_0, %c0_1] : memref<8x24x128xf32, #tpu.memory_space<vmem>>, vector<8x24x128xf32>
    tpu.vector_store %arg15[%c0, %c0_0, %c0_1], %0 {strides = array<i32>} : memref<8x24x128xf32, #tpu.memory_space<vmem>>, vector<8x24x128xf32>,
    %cst_2 = arith.constant 0.000000e+00 : f32
    %2 = vector.broadcast %cst_2 : f32 to vector<8x8x128xf32>
    %c0_3 = arith.constant 0 : index
    %c0_4 = arith.constant 0 : index
    %c0_5 = arith.constant 0 : index
    %3 = vector.load %arg16[%c0_3, %c0_4, %c0_5] : memref<8x24x128xf32, #tpu.memory_space<vmem>>, vector<8x8x128xf32>
    tpu.vector_store %arg16[%c0_3, %c0_4, %c0_5], %2 {strides = array<i32>} : memref<8x24x128xf32, #tpu.memory_space<vmem>>, vector<8x8x128xf32>,
    %c0_6 = arith.constant 0 : index
    %c0_7 = arith.constant 0 : index
    %c0_8 = arith.constant 0 : index
    %4 = vector.load %arg1[%c0_6, %c0_7, %c0_8] : memref<8x16x4xf32, #tpu.memory_space<vmem>>, vector<8x16x4xf32>
    %c0_9 = arith.constant 0 : index
    %c8 = arith.constant 8 : index
    %c0_10 = arith.constant 0 : index
    %5 = vector.load %arg15[%c0_9, %c8, %c0_10] : memref<8x24x128xf32, #tpu.memory_space<vmem>>, vector<8x16x4xf32>
    tpu.vector_store %arg15[%c0_9, %c8, %c0_10], %4 {strides = array<i32>} : memref<8x24x128xf32, #tpu.memory_space<vmem>>, vector<8x16x4xf32>,
    %c0_11 = arith.constant 0 : index
    %c8_12 = arith.constant 8 : index
    %c0_13 = arith.constant 0 : index
    %6 = vector.load %arg15[%c0_11, %c8_12, %c0_13] : memref<8x24x128xf32, #tpu.memory_space<vmem>>, vector<8x16x128xf32>
    %7 = vector.shape_cast %6 : vector<8x16x128xf32> to vector<128x128xf32>
    %8 = arith.truncf %7 : vector<128x128xf32> to vector<128x128xbf16>
    %c0_14 = arith.constant 0 : index
    %c7 = arith.constant 7 : index
    %c0_15 = arith.constant 0 : index
    %9 = vector.load %arg15[%c0_14, %c7, %c0_15] : memref<8x24x128xf32, #tpu.memory_space<vmem>>, vector<8x16x128xf32>
    %10 = vector.shape_cast %9 : vector<8x16x128xf32> to vector<128x128xf32>
    %11 = arith.truncf %10 : vector<128x128xf32> to vector<128x128xbf16>
    %12 = tpu.concatenate %11, %8 in 1 : vector<128x128xbf16>, vector<128x128xbf16> -> vector<128x256xbf16>
    %c0_16 = arith.constant 0 : index
    %c0_17 = arith.constant 0 : index
    %13 = vector.load %arg2[%c0_16, %c0_17] : memref<256x128xbf16, #tpu.memory_space<vmem>>, vector<256x128xbf16>
    %cst_18 = arith.constant dense<0.000000e+00> : vector<128x128xf32>
    %14 = tpu.matmul %12, %13, %cst_18 {dimension_numbers = #tpu.dot_dimension_numbers<[1], [0], [0], [1], [0, 0, 1, 1], [], []>} : vector<128x256xbf16>, vector<256x128xbf16>, vector<128x128xf32> -> vector<128x128xf32>
    %c0_19 = arith.constant 0 : index
    %c0_20 = arith.constant 0 : index
    %15 = vector.load %arg3[%c0_19, %c0_20] : memref<1x128xf32, #tpu.memory_space<vmem>>, vector<1x128xf32>
    %16 = vector.broadcast %15 : vector<1x128xf32> to vector<128x128xf32>
    %17 = arith.addf %14, %16 : vector<128x128xf32>
    %cst_21 = arith.constant 0.000000e+00 : f32
    %18 = vector.broadcast %cst_21 : f32 to vector<128x128xf32>
    %19 = arith.maximumf %17, %18 : vector<128x128xf32>
    %20 = vector.shape_cast %19 : vector<128x128xf32> to vector<8x16x128xf32>
    %c0_22 = arith.constant 0 : index
    %c8_23 = arith.constant 8 : index
    %c0_24 = arith.constant 0 : index
    %21 = vector.load %arg16[%c0_22, %c8_23, %c0_24] : memref<8x24x128xf32, #tpu.memory_space<vmem>>, vector<8x16x128xf32>
    tpu.vector_store %arg16[%c0_22, %c8_23, %c0_24], %20 {strides = array<i32>} : memref<8x24x128xf32, #tpu.memory_space<vmem>>, vector<8x16x128xf32>,
    %22 = arith.truncf %19 : vector<128x128xf32> to vector<128x128xbf16>
    %c0_25 = arith.constant 0 : index
    %c7_26 = arith.constant 7 : index
    %c0_27 = arith.constant 0 : index
    %23 = vector.load %arg16[%c0_25, %c7_26, %c0_27] : memref<8x24x128xf32, #tpu.memory_space<vmem>>, vector<8x16x128xf32>
    %24 = vector.shape_cast %23 : vector<8x16x128xf32> to vector<128x128xf32>
    %25 = arith.truncf %24 : vector<128x128xf32> to vector<128x128xbf16>
    %26 = tpu.concatenate %25, %22 in 1 : vector<128x128xbf16>, vector<128x128xbf16> -> vector<128x256xbf16>
    %c0_28 = arith.constant 0 : index
    %c0_29 = arith.constant 0 : index
    %27 = vector.load %arg4[%c0_28, %c0_29] : memref<256x128xbf16, #tpu.memory_space<vmem>>, vector<256x128xbf16>
    %cst_30 = arith.constant dense<0.000000e+00> : vector<128x128xf32>
    %28 = tpu.matmul %26, %27, %cst_30 {dimension_numbers = #tpu.dot_dimension_numbers<[1], [0], [0], [1], [0, 0, 1, 1], [], []>} : vector<128x256xbf16>, vector<256x128xbf16>, vector<128x128xf32> -> vector<128x128xf32>
    %c0_31 = arith.constant 0 : index
    %c0_32 = arith.constant 0 : index
    %29 = vector.load %arg5[%c0_31, %c0_32] : memref<1x128xf32, #tpu.memory_space<vmem>>, vector<1x128xf32>
    %30 = vector.broadcast %29 : vector<1x128xf32> to vector<128x128xf32>
    %31 = arith.addf %28, %30 : vector<128x128xf32>
    %cst_33 = arith.constant 0.000000e+00 : f32
    %32 = vector.broadcast %cst_33 : f32 to vector<128x128xf32>
    %33 = arith.maximumf %31, %32 : vector<128x128xf32>
    %c0_34 = arith.constant 0 : index
    %c0_35 = arith.constant 0 : index
    %34 = vector.load %arg6[%c0_34, %c0_35] : memref<128x128xbf16, #tpu.memory_space<vmem>>, vector<128x128xbf16>
    %cst_36 = arith.constant dense<0.000000e+00> : vector<128x128xf32>
    %35 = tpu.matmul %8, %34, %cst_36 {dimension_numbers = #tpu.dot_dimension_numbers<[1], [0], [0], [1], [0, 0, 1, 1], [], []>} : vector<128x128xbf16>, vector<128x128xbf16>, vector<128x128xf32> -> vector<128x128xf32>
    %c0_37 = arith.constant 0 : index
    %c0_38 = arith.constant 0 : index
    %36 = vector.load %arg7[%c0_37, %c0_38] : memref<1x128xf32, #tpu.memory_space<vmem>>, vector<1x128xf32>
    %37 = vector.broadcast %36 : vector<1x128xf32> to vector<128x128xf32>
    %38 = arith.addf %35, %37 : vector<128x128xf32>
    %39 = arith.addf %33, %38 : vector<128x128xf32>
    %cst_39 = arith.constant 0.000000e+00 : f32
    %40 = vector.broadcast %cst_39 : f32 to vector<128x128xf32>
    %41 = arith.maximumf %39, %40 : vector<128x128xf32>
    %42 = vector.shape_cast %41 : vector<128x128xf32> to vector<8x16x128xf32>
    %c0_40 = arith.constant 0 : index
    %c8_41 = arith.constant 8 : index
    %c0_42 = arith.constant 0 : index
    %43 = vector.load %arg15[%c0_40, %c8_41, %c0_42] : memref<8x24x128xf32, #tpu.memory_space<vmem>>, vector<8x16x128xf32>
    tpu.vector_store %arg15[%c0_40, %c8_41, %c0_42], %42 {strides = array<i32>} : memref<8x24x128xf32, #tpu.memory_space<vmem>>, vector<8x16x128xf32>,
    %44 = arith.truncf %41 : vector<128x128xf32> to vector<128x128xbf16>
    %c0_43 = arith.constant 0 : index
    %c6 = arith.constant 6 : index
    %c0_44 = arith.constant 0 : index
    %45 = vector.load %arg15[%c0_43, %c6, %c0_44] : memref<8x24x128xf32, #tpu.memory_space<vmem>>, vector<8x16x128xf32>
    %46 = vector.shape_cast %45 : vector<8x16x128xf32> to vector<128x128xf32>
    %47 = arith.truncf %46 : vector<128x128xf32> to vector<128x128xbf16>
    %48 = tpu.concatenate %47, %44 in 1 : vector<128x128xbf16>, vector<128x128xbf16> -> vector<128x256xbf16>
    %c0_45 = arith.constant 0 : index
    %c0_46 = arith.constant 0 : index
    %49 = vector.load %arg8[%c0_45, %c0_46] : memref<256x128xbf16, #tpu.memory_space<vmem>>, vector<256x128xbf16>
    %cst_47 = arith.constant dense<0.000000e+00> : vector<128x128xf32>
    %50 = tpu.matmul %48, %49, %cst_47 {dimension_numbers = #tpu.dot_dimension_numbers<[1], [0], [0], [1], [0, 0, 1, 1], [], []>} : vector<128x256xbf16>, vector<256x128xbf16>, vector<128x128xf32> -> vector<128x128xf32>
    %c0_48 = arith.constant 0 : index
    %c0_49 = arith.constant 0 : index
    %51 = vector.load %arg9[%c0_48, %c0_49] : memref<1x128xf32, #tpu.memory_space<vmem>>, vector<1x128xf32>
    %52 = vector.broadcast %51 : vector<1x128xf32> to vector<128x128xf32>
    %53 = arith.addf %50, %52 : vector<128x128xf32>
    %cst_50 = arith.constant 0.000000e+00 : f32
    %54 = vector.broadcast %cst_50 : f32 to vector<128x128xf32>
    %55 = arith.maximumf %53, %54 : vector<128x128xf32>
    %56 = vector.shape_cast %55 : vector<128x128xf32> to vector<8x16x128xf32>
    %c0_51 = arith.constant 0 : index
    %c8_52 = arith.constant 8 : index
    %c0_53 = arith.constant 0 : index
    %57 = vector.load %arg16[%c0_51, %c8_52, %c0_53] : memref<8x24x128xf32, #tpu.memory_space<vmem>>, vector<8x16x128xf32>
    tpu.vector_store %arg16[%c0_51, %c8_52, %c0_53], %56 {strides = array<i32>} : memref<8x24x128xf32, #tpu.memory_space<vmem>>, vector<8x16x128xf32>,
    %58 = arith.truncf %55 : vector<128x128xf32> to vector<128x128xbf16>
    %c0_54 = arith.constant 0 : index
    %c6_55 = arith.constant 6 : index
    %c0_56 = arith.constant 0 : index
    %59 = vector.load %arg16[%c0_54, %c6_55, %c0_56] : memref<8x24x128xf32, #tpu.memory_space<vmem>>, vector<8x16x128xf32>
    %60 = vector.shape_cast %59 : vector<8x16x128xf32> to vector<128x128xf32>
    %61 = arith.truncf %60 : vector<128x128xf32> to vector<128x128xbf16>
    %62 = tpu.concatenate %61, %58 in 1 : vector<128x128xbf16>, vector<128x128xbf16> -> vector<128x256xbf16>
    %c0_57 = arith.constant 0 : index
    %c0_58 = arith.constant 0 : index
    %63 = vector.load %arg10[%c0_57, %c0_58] : memref<256x128xbf16, #tpu.memory_space<vmem>>, vector<256x128xbf16>
    %cst_59 = arith.constant dense<0.000000e+00> : vector<128x128xf32>
    %64 = tpu.matmul %62, %63, %cst_59 {dimension_numbers = #tpu.dot_dimension_numbers<[1], [0], [0], [1], [0, 0, 1, 1], [], []>} : vector<128x256xbf16>, vector<256x128xbf16>, vector<128x128xf32> -> vector<128x128xf32>
    %c0_60 = arith.constant 0 : index
    %c0_61 = arith.constant 0 : index
    %65 = vector.load %arg11[%c0_60, %c0_61] : memref<1x128xf32, #tpu.memory_space<vmem>>, vector<1x128xf32>
    %66 = vector.broadcast %65 : vector<1x128xf32> to vector<128x128xf32>
    %67 = arith.addf %64, %66 : vector<128x128xf32>
    %cst_62 = arith.constant 0.000000e+00 : f32
    %68 = vector.broadcast %cst_62 : f32 to vector<128x128xf32>
    %69 = arith.maximumf %67, %68 : vector<128x128xf32>
    %70 = arith.addf %69, %41 : vector<128x128xf32>
    %cst_63 = arith.constant 0.000000e+00 : f32
    %71 = vector.broadcast %cst_63 : f32 to vector<128x128xf32>
    %72 = arith.maximumf %70, %71 : vector<128x128xf32>
    %73 = tpu.iota {dimensions = array<i32: 1>} : vector<8x128xi32>
    %74 = tpu.iota {dimensions = array<i32: 0>} : vector<8x128xi32>
    %c16_i32 = arith.constant 16 : i32
    %75 = vector.broadcast %c16_i32 : i32 to vector<8x128xi32>
    %76 = arith.muli %74, %75 : vector<8x128xi32>
    %c15_i32 = arith.constant 15 : i32
    %77 = vector.broadcast %c15_i32 : i32 to vector<8x128xi32>
    %78 = arith.addi %76, %77 : vector<8x128xi32>
    %79 = arith.cmpi eq, %73, %78 : vector<8x128xi32>
    %80 = arith.extui %79 : vector<8x128xi1> to vector<8x128xi32>
    %81 = arith.sitofp %80 : vector<8x128xi32> to vector<8x128xf32>
    %82 = arith.truncf %81 : vector<8x128xf32> to vector<8x128xbf16>
    %83 = arith.truncf %72 : vector<128x128xf32> to vector<128x128xbf16>
    %cst_64 = arith.constant dense<0.000000e+00> : vector<8x128xf32>
    %84 = tpu.matmul %82, %83, %cst_64 {dimension_numbers = #tpu.dot_dimension_numbers<[1], [0], [0], [1], [0, 0, 1, 1], [], []>} : vector<8x128xbf16>, vector<128x128xbf16>, vector<8x128xf32> -> vector<8x128xf32>
    %85 = arith.truncf %84 : vector<8x128xf32> to vector<8x128xbf16>
    %c0_65 = arith.constant 0 : index
    %c0_66 = arith.constant 0 : index
    %86 = vector.load %arg12[%c0_65, %c0_66] : memref<128x128xbf16, #tpu.memory_space<vmem>>, vector<128x128xbf16>
    %cst_67 = arith.constant dense<0.000000e+00> : vector<8x128xf32>
    %87 = tpu.matmul %85, %86, %cst_67 {dimension_numbers = #tpu.dot_dimension_numbers<[1], [0], [0], [1], [0, 0, 1, 1], [], []>} : vector<8x128xbf16>, vector<128x128xbf16>, vector<8x128xf32> -> vector<8x128xf32>
    %c0_68 = arith.constant 0 : index
    %c0_69 = arith.constant 0 : index
    %88 = vector.load %arg13[%c0_68, %c0_69] : memref<1x128xf32, #tpu.memory_space<vmem>>, vector<1x128xf32>
    %89 = vector.broadcast %88 : vector<1x128xf32> to vector<8x128xf32>
    %90 = arith.addf %87, %89 : vector<8x128xf32>
    %91 = tpu.iota {dimensions = array<i32: 1>} : vector<8x128xi32>
    %c5_i32 = arith.constant 5 : i32
    %92 = vector.broadcast %c5_i32 : i32 to vector<8x128xi32>
    %93 = arith.cmpi slt, %91, %92 : vector<8x128xi32>
    %cst_70 = arith.constant -1.000000e+30 : f32
    %94 = vector.broadcast %cst_70 : f32 to vector<8x128xf32>
    %95 = arith.select %93, %90, %94 : vector<8x128xi1>, vector<8x128xf32>
    %cst_71 = arith.constant dense<0xFF800000> : vector<8xf32>
    %96 = vector.multi_reduction <maximumf>, %95, %cst_71 [1] : vector<8x128xf32> to vector<8xf32>
    %97 = vector.shape_cast %96 : vector<8xf32> to vector<8x1xf32>
    %98 = vector.broadcast %97 : vector<8x1xf32> to vector<8x128xf32>
    %99 = arith.subf %95, %98 : vector<8x128xf32>
    %100 = math.exp %99 : vector<8x128xf32>
    %cst_72 = arith.constant dense<0.000000e+00> : vector<8xf32>
    %101 = vector.multi_reduction <add>, %100, %cst_72 [1] : vector<8x128xf32> to vector<8xf32>
    %102 = vector.shape_cast %101 : vector<8xf32> to vector<8x1xf32>
    %103 = math.log %102 : vector<8x1xf32>
    %104 = vector.broadcast %103 : vector<8x1xf32> to vector<8x128xf32>
    %105 = arith.subf %99, %104 : vector<8x128xf32>
    %c0_73 = arith.constant 0 : index
    %c0_74 = arith.constant 0 : index
    %c0_75 = arith.constant 0 : index
    %106 = vector.load %arg14[%c0_73, %c0_74, %c0_75] : memref<1x8x128xf32, #tpu.memory_space<vmem>>, vector<1x8x128xf32>
    %107 = vector.shape_cast %106 : vector<1x8x128xf32> to vector<8x128xf32>
    %108 = vector.shape_cast %105 : vector<8x128xf32> to vector<1x8x128xf32>
    tpu.vector_store %arg14[%c0_73, %c0_74, %c0_75], %108 {strides = array<i32>} : memref<1x8x128xf32, #tpu.memory_space<vmem>>, vector<1x8x128xf32>,
    return
  }
  func.func @transform_0(%arg0: i32) -> (i32, i32, i32) {
    %c0_i32 = arith.constant 0 : i32
    %c0_i32_0 = arith.constant 0 : i32
    %c0_i32_1 = arith.constant 0 : i32
    return %arg0, %c0_i32, %c0_i32_0 : i32, i32, i32
  }
  func.func @transform_1(%arg0: i32) -> (i32, i32) {
    %c0_i32 = arith.constant 0 : i32
    %c0_i32_0 = arith.constant 0 : i32
    %c0_i32_1 = arith.constant 0 : i32
    return %c0_i32, %c0_i32_0 : i32, i32
  }
  func.func @transform_2(%arg0: i32) -> (i32, i32) {
    %c0_i32 = arith.constant 0 : i32
    %c0_i32_0 = arith.constant 0 : i32
    %c0_i32_1 = arith.constant 0 : i32
    return %c0_i32, %c0_i32_0 : i32, i32
  }
  func.func @transform_3(%arg0: i32) -> (i32, i32) {
    %c0_i32 = arith.constant 0 : i32
    %c0_i32_0 = arith.constant 0 : i32
    %c0_i32_1 = arith.constant 0 : i32
    return %c0_i32, %c0_i32_0 : i32, i32
  }
  func.func @transform_4(%arg0: i32) -> (i32, i32) {
    %c0_i32 = arith.constant 0 : i32
    %c0_i32_0 = arith.constant 0 : i32
    %c0_i32_1 = arith.constant 0 : i32
    return %c0_i32, %c0_i32_0 : i32, i32
  }
  func.func @transform_5(%arg0: i32) -> (i32, i32) {
    %c0_i32 = arith.constant 0 : i32
    %c0_i32_0 = arith.constant 0 : i32
    %c0_i32_1 = arith.constant 0 : i32
    return %c0_i32, %c0_i32_0 : i32, i32
  }
  func.func @transform_6(%arg0: i32) -> (i32, i32) {
    %c0_i32 = arith.constant 0 : i32
    %c0_i32_0 = arith.constant 0 : i32
    %c0_i32_1 = arith.constant 0 : i32
    return %c0_i32, %c0_i32_0 : i32, i32
  }
  func.func @transform_7(%arg0: i32) -> (i32, i32) {
    %c0_i32 = arith.constant 0 : i32
    %c0_i32_0 = arith.constant 0 : i32
    %c0_i32_1 = arith.constant 0 : i32
    return %c0_i32, %c0_i32_0 : i32, i32
  }
  func.func @transform_8(%arg0: i32) -> (i32, i32) {
    %c0_i32 = arith.constant 0 : i32
    %c0_i32_0 = arith.constant 0 : i32
    %c0_i32_1 = arith.constant 0 : i32
    return %c0_i32, %c0_i32_0 : i32, i32
  }
  func.func @transform_9(%arg0: i32) -> (i32, i32) {
    %c0_i32 = arith.constant 0 : i32
    %c0_i32_0 = arith.constant 0 : i32
    %c0_i32_1 = arith.constant 0 : i32
    return %c0_i32, %c0_i32_0 : i32, i32
  }
  func.func @transform_10(%arg0: i32) -> (i32, i32) {
    %c0_i32 = arith.constant 0 : i32
    %c0_i32_0 = arith.constant 0 : i32
    %c0_i32_1 = arith.constant 0 : i32
    return %c0_i32, %c0_i32_0 : i32, i32
  }
  func.func @transform_11(%arg0: i32) -> (i32, i32) {
    %c0_i32 = arith.constant 0 : i32
    %c0_i32_0 = arith.constant 0 : i32
    %c0_i32_1 = arith.constant 0 : i32
    return %c0_i32, %c0_i32_0 : i32, i32
  }
  func.func @transform_12(%arg0: i32) -> (i32, i32) {
    %c0_i32 = arith.constant 0 : i32
    %c0_i32_0 = arith.constant 0 : i32
    %c0_i32_1 = arith.constant 0 : i32
    return %c0_i32, %c0_i32_0 : i32, i32
  }
  func.func @transform_13(%arg0: i32) -> (i32, i32, i32) {
    %c0_i32 = arith.constant 0 : i32
    %c0_i32_0 = arith.constant 0 : i32
    %c0_i32_1 = arith.constant 0 : i32
    return %arg0, %c0_i32, %c0_i32_0 : i32, i32, i32
  }
}

</mosaic_0001>

<llo_original>
// kernel: tpu_custom_call.1
$region0: #{tpu_custom_call.1}
  #allocation0 [shape = 'u32[]', space=smem, size = 0x4, offset = 0x4, fixed_abs, tag = 'smem constant byte address 0x4 - core index']
  #allocation1 [shape = 'u32[144,128]{1,0:T(1,128)}', space=vmem, size = 0x12000, scoped, tag = 'internal scratch']
  #allocation2 [shape = 'f32[8,24,128]{2,1,0:T(8,128)}', space=vmem, size = 0x18000, scoped, tag = 'scratch operand']
  #allocation3 [shape = 'f32[8,24,128]{2,1,0:T(8,128)}', space=vmem, size = 0x18000, scoped, tag = 'scratch operand']
  %s0 = inlined_call_operand.vmem [shape: f32[16,16,4], index: 0, kind: input, shape index: {}]
  %s1 = inlined_call_operand.vmem [shape: bf16[256,128], index: 1, kind: input, shape index: {}]
  %s2 = inlined_call_operand.vmem [shape: f32[1,128], index: 2, kind: input, shape index: {}]
  %s3 = inlined_call_operand.vmem [shape: bf16[256,128], index: 3, kind: input, shape index: {}]
  %s4 = inlined_call_operand.vmem [shape: f32[1,128], index: 4, kind: input, shape index: {}]
  %s5 = inlined_call_operand.vmem [shape: bf16[128,128], index: 5, kind: input, shape index: {}]
  %s6 = inlined_call_operand.vmem [shape: f32[1,128], index: 6, kind: input, shape index: {}]
  %s7 = inlined_call_operand.hbm [shape: bf16[256,128], index: 7, kind: input, shape index: {}]
  %s8 = inlined_call_operand.vmem [shape: f32[1,128], index: 8, kind: input, shape index: {}]
  %s9 = inlined_call_operand.hbm [shape: bf16[256,128], index: 9, kind: input, shape index: {}]
  %s10 = inlined_call_operand.vmem [shape: f32[1,128], index: 10, kind: input, shape index: {}]
  %s11 = inlined_call_operand.hbm [shape: bf16[128,128], index: 11, kind: input, shape index: {}]
  %s12 = inlined_call_operand.vmem [shape: f32[1,128], index: 12, kind: input, shape index: {}]
  %s13 = inlined_call_operand.hbm [shape: f32[2,8,128], index: 13, kind: output, shape index: {}]
  %s14 = sld [smem:[#allocation0]]
  $region97: #{tpu_custom_call.1} parent=0
    _
  %s16 = ssub.s32 1, %s14
  %s17 = scalar_select 0, %s16, %s14
  $region1: #{tpu_custom_call.1} parent=0
    #allocation4 [shape = 'u8[65536]{0}', space=vmem, size = 0x10000, scoped, tag = 'input window, operand 7, single buffered']
    #allocation5 [shape = 's32[2]{0}', space=sflag, size = 0x8, scoped, tag = 'scoped memory for tpu_custom_call.1']
    #allocation6 [shape = 's32[2]{0}', space=sflag, size = 0x8, scoped, tag = 'scoped memory for tpu_custom_call.1']
    #allocation7 [shape = 'u8[65536]{0}', space=vmem, size = 0x10000, scoped, tag = 'input window, operand 9, single buffered']
    #allocation8 [shape = 's32[1]{0}', space=sflag, size = 0x4, scoped, tag = 'scoped memory for tpu_custom_call.1']
    #allocation9 [shape = 'u8[32768]{0}', space=vmem, size = 0x8000, scoped, tag = 'input window, operand 11, single buffered']
    #allocation10 [shape = 'u8[8192]{0}', space=vmem, size = 0x2000, scoped, tag = 'output window, operand 0']
    %18 = vsyncpa [#allocation5], 0
    %19 = vsyncpa [#allocation8], 0
    %20 = vsyncpa [#allocation6], 0
    %s21 = scalar_lea.sflag [#allocation6], 1
    %22 = vsyncpa %s21, 0
    loop: start=0, step=1, limit=4
    $region2: #{tpu_custom_call.1} parent=1 // loop_pre_header
      _
    $region3: #{tpu_custom_call.1} parent=1 // loop_header
      %s24 = sphi 0, %s28
      %p25 = scmp.ge.s32.totalorder %s24, 4
      %s34 = sphi 0, %s36
      %s37 = sphi 0, %s34
      %s38 = sphi 0, %s37
      %s54 = sphi 0, %s38
      %s58 = sphi 0, %s58
      %s60 = sphi 0, %s58
      %s61 = sphi 0, %s60
      %s75 = sphi 0, %s61
      %s79 = sphi 0, %s79
      %s81 = sphi 0, %s79
      %s82 = sphi 0, %s81
      %s96 = sphi 0, %s82
      %s100 = sphi 0, %s100
      %s102 = sphi 0, %s100
      %s103 = sphi 0, %s102
      %s117 = sphi 0, %s103
      %s121 = sphi 0, %s121
      %s123 = sphi 0, %s121
      %s124 = sphi 0, %s123
      %s138 = sphi 0, %s124
      %s142 = sphi 0, %s142
      %s144 = sphi 0, %s142
      %s145 = sphi 0, %s144
      %s159 = sphi 0, %s145
      %s163 = sphi 0, %s163
      %s165 = sphi 0, %s163
      %s166 = sphi 0, %s165
      %s180 = sphi 0, %s166
      %s184 = sphi 0, %s184
      %s186 = sphi 0, %s184
      %s187 = sphi 0, %s186
      %s201 = sphi 0, %s187
      %s205 = sphi 0, %s205
      %s207 = sphi 0, %s205
      %s208 = sphi 0, %s207
      %s222 = sphi 0, %s208
      %s226 = sphi 0, %s226
      %s228 = sphi 0, %s226
      %s229 = sphi 0, %s228
      %s243 = sphi 0, %s229
      %s247 = sphi 0, %s247
      %s249 = sphi 0, %s247
      %s250 = sphi 0, %s249
      %s264 = sphi 0, %s250
      %s268 = sphi 0, %s268
      %s270 = sphi 0, %s268
      %s271 = sphi 0, %s270
      %s285 = sphi 0, %s271
      %s289 = sphi 0, %s289
      %s291 = sphi 0, %s289
      %s292 = sphi 0, %s291
      %s306 = sphi 0, %s292
      %s312 = sphi 0, %s314
      %s315 = sphi 0, %s312
      %s316 = sphi 0, %s315
      %s332 = sphi 0, %s316
    $region4: #{tpu_custom_call.1} parent=1 // loop_header_branch
      %27 = sbr.rel (%p25) target = $region8
    $region5: #{tpu_custom_call.1} parent=1 // loop_body
      %s29 = ssub.s32 %s24, 1
      %s30 = ssub.s32 %s24, 2
      %s31 = sadd.s32 %s24, 1
      %s32 = ssub.s32 %s24, %s31
      %p33 = scmp.eq.s32.totalorder %s32, 0
      %s35 = sadd.s32 %s34, 1
      %s36 = scalar_select %p33, %s34, %s35
      %p39 = pneg %p33
      %p40 = scmp.eq.s32.totalorder %s24, 1
      %p41 = por %p39, %p40
      %p42 = scmp.ne.s32.totalorder %s34, %s37
      %p43 = scmp.eq.s32.totalorder %s24, 0
      %p44 = por %p42, %p43
      %p45 = scmp.ne.s32.totalorder %s34, %s37
      %p46 = scmp.eq.s32.totalorder %s29, 1
      %p47 = por %p45, %p46
      %p48 = scmp.ne.s32.totalorder %s37, %s38
      %p49 = scmp.eq.s32.totalorder %s29, 0
      %p50 = por %p48, %p49
      %p51 = scmp.ne.s32.totalorder %s37, %s38
      %p52 = scmp.eq.s32.totalorder %s30, 1
      %p53 = por %p51, %p52
      %p55 = scmp.ne.s32.totalorder %s38, %s54
      %p56 = scmp.eq.s32.totalorder %s30, 0
      %p57 = por %p55, %p56
      %s59 = sadd.s32 %s58, 1
      %p62 = scmp.eq.s32.totalorder %s24, 1
      %p63 = scmp.ne.s32.totalorder %s58, %s60
      %p64 = scmp.eq.s32.totalorder %s24, 0
      %p65 = por %p63, %p64
      %p66 = scmp.ne.s32.totalorder %s58, %s60
      %p67 = scmp.eq.s32.totalorder %s29, 1
      %p68 = por %p66, %p67
      %p69 = scmp.ne.s32.totalorder %s60, %s61
      %p70 = scmp.eq.s32.totalorder %s29, 0
      %p71 = por %p69, %p70
      %p72 = scmp.ne.s32.totalorder %s60, %s61
      %p73 = scmp.eq.s32.totalorder %s30, 1
      %p74 = por %p72, %p73
      %p76 = scmp.ne.s32.totalorder %s61, %s75
      %p77 = scmp.eq.s32.totalorder %s30, 0
      %p78 = por %p76, %p77
      %s80 = sadd.s32 %s79, 1
      %p83 = scmp.eq.s32.totalorder %s24, 1
      %p84 = scmp.ne.s32.totalorder %s79, %s81
      %p85 = scmp.eq.s32.totalorder %s24, 0
      %p86 = por %p84, %p85
      %p87 = scmp.ne.s32.totalorder %s79, %s81
      %p88 = scmp.eq.s32.totalorder %s29, 1
      %p89 = por %p87, %p88
      %p90 = scmp.ne.s32.totalorder %s81, %s82
      %p91 = scmp.eq.s32.totalorder %s29, 0
      %p92 = por %p90, %p91
      %p93 = scmp.ne.s32.totalorder %s81, %s82
      %p94 = scmp.eq.s32.totalorder %s30, 1
      %p95 = por %p93, %p94
      %p97 = scmp.ne.s32.totalorder %s82, %s96
      %p98 = scmp.eq.s32.totalorder %s30, 0
      %p99 = por %p97, %p98
      %s101 = sadd.s32 %s100, 1
      %p104 = scmp.eq.s32.totalorder %s24, 1
      %p105 = scmp.ne.s32.totalorder %s100, %s102
      %p106 = scmp.eq.s32.totalorder %s24, 0
      %p107 = por %p105, %p106
      %p108 = scmp.ne.s32.totalorder %s100, %s102
      %p109 = scmp.eq.s32.totalorder %s29, 1
      %p110 = por %p108, %p109
      %p111 = scmp.ne.s32.totalorder %s102, %s103
      %p112 = scmp.eq.s32.totalorder %s29, 0
      %p113 = por %p111, %p112
      %p114 = scmp.ne.s32.totalorder %s102, %s103
      %p115 = scmp.eq.s32.totalorder %s30, 1
      %p116 = por %p114, %p115
      %p118 = scmp.ne.s32.totalorder %s103, %s117
      %p119 = scmp.eq.s32.totalorder %s30, 0
      %p120 = por %p118, %p119
      %s122 = sadd.s32 %s121, 1
      %p125 = scmp.eq.s32.totalorder %s24, 1
      %p126 = scmp.ne.s32.totalorder %s121, %s123
      %p127 = scmp.eq.s32.totalorder %s24, 0
      %p128 = por %p126, %p127
      %p129 = scmp.ne.s32.totalorder %s121, %s123
      %p130 = scmp.eq.s32.totalorder %s29, 1
      %p131 = por %p129, %p130
      %p132 = scmp.ne.s32.totalorder %s123, %s124
      %p133 = scmp.eq.s32.totalorder %s29, 0
      %p134 = por %p132, %p133
      %p135 = scmp.ne.s32.totalorder %s123, %s124
      %p136 = scmp.eq.s32.totalorder %s30, 1
      %p137 = por %p135, %p136
      %p139 = scmp.ne.s32.totalorder %s124, %s138
      %p140 = scmp.eq.s32.totalorder %s30, 0
      %p141 = por %p139, %p140
      %s143 = sadd.s32 %s142, 1
      %p146 = scmp.eq.s32.totalorder %s24, 1
      %p147 = scmp.ne.s32.totalorder %s142, %s144
      %p148 = scmp.eq.s32.totalorder %s24, 0
      %p149 = por %p147, %p148
      %p150 = scmp.ne.s32.totalorder %s142, %s144
      %p151 = scmp.eq.s32.totalorder %s29, 1
      %p152 = por %p150, %p151
      %p153 = scmp.ne.s32.totalorder %s144, %s145
      %p154 = scmp.eq.s32.totalorder %s29, 0
      %p155 = por %p153, %p154
      %p156 = scmp.ne.s32.totalorder %s144, %s145
      %p157 = scmp.eq.s32.totalorder %s30, 1
      %p158 = por %p156, %p157
      %p160 = scmp.ne.s32.totalorder %s145, %s159
      %p161 = scmp.eq.s32.totalorder %s30, 0
      %p162 = por %p160, %p161
      %s164 = sadd.s32 %s163, 1
      %p167 = scmp.eq.s32.totalorder %s24, 1
      %p168 = scmp.ne.s32.totalorder %s163, %s165
      %p169 = scmp.eq.s32.totalorder %s24, 0
      %p170 = por %p168, %p169
      %p171 = scmp.ne.s32.totalorder %s163, %s165
      %p172 = scmp.eq.s32.totalorder %s29, 1
      %p173 = por %p171, %p172
      %p174 = scmp.ne.s32.totalorder %s165, %s166
      %p175 = scmp.eq.s32.totalorder %s29, 0
      %p176 = por %p174, %p175
      %p177 = scmp.ne.s32.totalorder %s165, %s166
      %p178 = scmp.eq.s32.totalorder %s30, 1
      %p179 = por %p177, %p178
      %p181 = scmp.ne.s32.totalorder %s166, %s180
      %p182 = scmp.eq.s32.totalorder %s30, 0
      %p183 = por %p181, %p182
      %s185 = sadd.s32 %s184, 1
      %p188 = scmp.eq.s32.totalorder %s24, 1
      %p189 = scmp.ne.s32.totalorder %s184, %s186
      %p190 = scmp.eq.s32.totalorder %s24, 0
      %p191 = por %p189, %p190
      %p192 = scmp.ne.s32.totalorder %s184, %s186
      %p193 = scmp.eq.s32.totalorder %s29, 1
      %p194 = por %p192, %p193
      %p195 = scmp.ne.s32.totalorder %s186, %s187
      %p196 = scmp.eq.s32.totalorder %s29, 0
      %p197 = por %p195, %p196
      %p198 = scmp.ne.s32.totalorder %s186, %s187
      %p199 = scmp.eq.s32.totalorder %s30, 1
      %p200 = por %p198, %p199
      %p202 = scmp.ne.s32.totalorder %s187, %s201
      %p203 = scmp.eq.s32.totalorder %s30, 0
      %p204 = por %p202, %p203
      %s206 = sadd.s32 %s205, 1
      %p209 = scmp.eq.s32.totalorder %s24, 1
      %p210 = scmp.ne.s32.totalorder %s205, %s207
      %p211 = scmp.eq.s32.totalorder %s24, 0
      %p212 = por %p210, %p211
      %p213 = scmp.ne.s32.totalorder %s205, %s207
      %p214 = scmp.eq.s32.totalorder %s29, 1
      %p215 = por %p213, %p214
      %p216 = scmp.ne.s32.totalorder %s207, %s208
      %p217 = scmp.eq.s32.totalorder %s29, 0
      %p218 = por %p216, %p217
      %p219 = scmp.ne.s32.totalorder %s207, %s208
      %p220 = scmp.eq.s32.totalorder %s30, 1
      %p221 = por %p219, %p220
      %p223 = scmp.ne.s32.totalorder %s208, %s222
      %p224 = scmp.eq.s32.totalorder %s30, 0
      %p225 = por %p223, %p224
      %s227 = sadd.s32 %s226, 1
      %p230 = scmp.eq.s32.totalorder %s24, 1
      %p231 = scmp.ne.s32.totalorder %s226, %s228
      %p232 = scmp.eq.s32.totalorder %s24, 0
      %p233 = por %p231, %p232
      %p234 = scmp.ne.s32.totalorder %s226, %s228
      %p235 = scmp.eq.s32.totalorder %s29, 1
      %p236 = por %p234, %p235
      %p237 = scmp.ne.s32.totalorder %s228, %s229
      %p238 = scmp.eq.s32.totalorder %s29, 0
      %p239 = por %p237, %p238
      %p240 = scmp.ne.s32.totalorder %s228, %s229
      %p241 = scmp.eq.s32.totalorder %s30, 1
      %p242 = por %p240, %p241
      %p244 = scmp.ne.s32.totalorder %s229, %s243
      %p245 = scmp.eq.s32.totalorder %s30, 0
      %p246 = por %p244, %p245
      %s248 = sadd.s32 %s247, 1
      %p251 = scmp.eq.s32.totalorder %s24, 1
      %p252 = scmp.ne.s32.totalorder %s247, %s249
      %p253 = scmp.eq.s32.totalorder %s24, 0
      %p254 = por %p252, %p253
      %p255 = scmp.ne.s32.totalorder %s247, %s249
      %p256 = scmp.eq.s32.totalorder %s29, 1
      %p257 = por %p255, %p256
      %p258 = scmp.ne.s32.totalorder %s249, %s250
      %p259 = scmp.eq.s32.totalorder %s29, 0
      %p260 = por %p258, %p259
      %p261 = scmp.ne.s32.totalorder %s249, %s250
      %p262 = scmp.eq.s32.totalorder %s30, 1
      %p263 = por %p261, %p262
      %p265 = scmp.ne.s32.totalorder %s250, %s264
      %p266 = scmp.eq.s32.totalorder %s30, 0
      %p267 = por %p265, %p266
      %s269 = sadd.s32 %s268, 1
      %p272 = scmp.eq.s32.totalorder %s24, 1
      %p273 = scmp.ne.s32.totalorder %s268, %s270
      %p274 = scmp.eq.s32.totalorder %s24, 0
      %p275 = por %p273, %p274
      %p276 = scmp.ne.s32.totalorder %s268, %s270
      %p277 = scmp.eq.s32.totalorder %s29, 1
      %p278 = por %p276, %p277
      %p279 = scmp.ne.s32.totalorder %s270, %s271
      %p280 = scmp.eq.s32.totalorder %s29, 0
      %p281 = por %p279, %p280
      %p282 = scmp.ne.s32.totalorder %s270, %s271
      %p283 = scmp.eq.s32.totalorder %s30, 1
      %p284 = por %p282, %p283
      %p286 = scmp.ne.s32.totalorder %s271, %s285
      %p287 = scmp.eq.s32.totalorder %s30, 0
      %p288 = por %p286, %p287
      %s290 = sadd.s32 %s289, 1
      %p293 = scmp.eq.s32.totalorder %s24, 1
      %p294 = scmp.ne.s32.totalorder %s289, %s291
      %p295 = scmp.eq.s32.totalorder %s24, 0
      %p296 = por %p294, %p295
      %p297 = scmp.ne.s32.totalorder %s289, %s291
      %p298 = scmp.eq.s32.totalorder %s29, 1
      %p299 = por %p297, %p298
      %p300 = scmp.ne.s32.totalorder %s291, %s292
      %p301 = scmp.eq.s32.totalorder %s29, 0
      %p302 = por %p300, %p301
      %p303 = scmp.ne.s32.totalorder %s291, %s292
      %p304 = scmp.eq.s32.totalorder %s30, 1
      %p305 = por %p303, %p304
      %p307 = scmp.ne.s32.totalorder %s292, %s306
      %p308 = scmp.eq.s32.totalorder %s30, 0
      %p309 = por %p307, %p308
      %s310 = ssub.s32 %s24, %s31
      %p311 = scmp.eq.s32.totalorder %s310, 0
      %s313 = sadd.s32 %s312, 1
      %s314 = scalar_select %p311, %s312, %s313
      %p317 = pneg %p311
      %p318 = scmp.eq.s32.totalorder %s24, 1
      %p319 = por %p317, %p318
      %p320 = scmp.ne.s32.totalorder %s312, %s315
      %p321 = scmp.eq.s32.totalorder %s24, 0
      %p322 = por %p320, %p321
      %p323 = scmp.ne.s32.totalorder %s312, %s315
      %p324 = scmp.eq.s32.totalorder %s29, 1
      %p325 = por %p323, %p324
      %p326 = scmp.ne.s32.totalorder %s315, %s316
      %p327 = scmp.eq.s32.totalorder %s29, 0
      %p328 = por %p326, %p327
      %p329 = scmp.ne.s32.totalorder %s315, %s316
      %p330 = scmp.eq.s32.totalorder %s30, 1
      %p331 = por %p329, %p330
      %p333 = scmp.ne.s32.totalorder %s316, %s332
      %p334 = scmp.eq.s32.totalorder %s30, 0
      %p335 = por %p333, %p334
      %p336 = scmp.le.s32.totalorder 1, %s24
      %p337 = scmp.lt.s32.totalorder %s24, 3
      %p338 = pnand %p336, %p337
      %p339 = pneg %p338
      // Predicated region
      $region9: #{tpu_custom_call.1} parent=5 // pred_check
        _
      $region10: #{tpu_custom_call.1} parent=5 // pred_check_branch
        %341 = sbr.rel (%p338) target = $region12
      $region11: #{tpu_custom_call.1} parent=5 // pred_region
        %s342 = ssub.s32 %s24, 1
        // Predicated region
        $region13: #{tpu_custom_call.1} parent=11 // pred_check
          %p343 = pneg %p71
        $region14: #{tpu_custom_call.1} parent=11 // pred_check_branch
          %345 = sbr.rel (%p343) target = $region16
        $region15: #{tpu_custom_call.1} parent=11 // pred_region
          _
        $region16: #{tpu_custom_call.1} parent=11 // pred_fallthru
          _
        // Predicated region
        $region17: #{tpu_custom_call.1} parent=11 // pred_check
          %p346 = pneg %p92
        $region18: #{tpu_custom_call.1} parent=11 // pred_check_branch
          %348 = sbr.rel (%p346) target = $region20
        $region19: #{tpu_custom_call.1} parent=11 // pred_region
          _
        $region20: #{tpu_custom_call.1} parent=11 // pred_fallthru
          _
        // Predicated region
        $region21: #{tpu_custom_call.1} parent=11 // pred_check
          %p349 = pneg %p113
        $region22: #{tpu_custom_call.1} parent=11 // pred_check_branch
          %351 = sbr.rel (%p349) target = $region24
        $region23: #{tpu_custom_call.1} parent=11 // pred_region
          _
        $region24: #{tpu_custom_call.1} parent=11 // pred_fallthru
          _
        // Predicated region
        $region25: #{tpu_custom_call.1} parent=11 // pred_check
          %p352 = pneg %p134
        $region26: #{tpu_custom_call.1} parent=11 // pred_check_branch
          %354 = sbr.rel (%p352) target = $region28
        $region27: #{tpu_custom_call.1} parent=11 // pred_region
          _
        $region28: #{tpu_custom_call.1} parent=11 // pred_fallthru
          _
        // Predicated region
        $region29: #{tpu_custom_call.1} parent=11 // pred_check
          %p355 = pneg %p155
        $region30: #{tpu_custom_call.1} parent=11 // pred_check_branch
          %357 = sbr.rel (%p355) target = $region32
        $region31: #{tpu_custom_call.1} parent=11 // pred_region
          _
        $region32: #{tpu_custom_call.1} parent=11 // pred_fallthru
          _
        // Predicated region
        $region33: #{tpu_custom_call.1} parent=11 // pred_check
          %p358 = pneg %p176
        $region34: #{tpu_custom_call.1} parent=11 // pred_check_branch
          %360 = sbr.rel (%p358) target = $region36
        $region35: #{tpu_custom_call.1} parent=11 // pred_region
          _
        $region36: #{tpu_custom_call.1} parent=11 // pred_fallthru
          _
        // Predicated region
        $region37: #{tpu_custom_call.1} parent=11 // pred_check
          %p361 = pneg %p197
        $region38: #{tpu_custom_call.1} parent=11 // pred_check_branch
          %363 = sbr.rel (%p361) target = $region40
        $region39: #{tpu_custom_call.1} parent=11 // pred_region
          %s365 = ssub.s32 2048, 2048
          %366 = vsyncadd [#allocation5], %s365
          %s367 = sshll.u32 [#allocation4], 4
          %s368 = int_to_ptr.vmem [resolvable:$true] %s367
          %373 = dma.hbm_to_vmem [thread:$0]  %s7, 2048, %s368, [#allocation5], 64, 64, 4
        $region40: #{tpu_custom_call.1} parent=11 // pred_fallthru
          _
        // Predicated region
        $region41: #{tpu_custom_call.1} parent=11 // pred_check
          %p374 = pneg %p218
        $region42: #{tpu_custom_call.1} parent=11 // pred_check_branch
          %376 = sbr.rel (%p374) target = $region44
        $region43: #{tpu_custom_call.1} parent=11 // pred_region
          _
        $region44: #{tpu_custom_call.1} parent=11 // pred_fallthru
          _
        // Predicated region
        $region45: #{tpu_custom_call.1} parent=11 // pred_check
          %p377 = pneg %p239
        $region46: #{tpu_custom_call.1} parent=11 // pred_check_branch
          %379 = sbr.rel (%p377) target = $region48
        $region47: #{tpu_custom_call.1} parent=11 // pred_region
          %s381 = ssub.s32 2048, 2048
          %382 = vsyncadd [#allocation8], %s381
          %s383 = sshll.u32 [#allocation7], 4
          %s384 = int_to_ptr.vmem [resolvable:$true] %s383
          %389 = dma.hbm_to_vmem [thread:$0]  %s9, 2048, %s384, [#allocation8], 64, 64, 4
        $region48: #{tpu_custom_call.1} parent=11 // pred_fallthru
          _
        // Predicated region
        $region49: #{tpu_custom_call.1} parent=11 // pred_check
          %p390 = pneg %p260
        $region50: #{tpu_custom_call.1} parent=11 // pred_check_branch
          %392 = sbr.rel (%p390) target = $region52
        $region51: #{tpu_custom_call.1} parent=11 // pred_region
          _
        $region52: #{tpu_custom_call.1} parent=11 // pred_fallthru
          _
        // Predicated region
        $region53: #{tpu_custom_call.1} parent=11 // pred_check
          %p393 = pneg %p281
        $region54: #{tpu_custom_call.1} parent=11 // pred_check_branch
          %395 = sbr.rel (%p393) target = $region56
        $region55: #{tpu_custom_call.1} parent=11 // pred_region
          %s397 = ssub.s32 1024, 1024
          %398 = vsyncadd [#allocation8], %s397
          %s399 = sshll.u32 [#allocation9], 4
          %s400 = int_to_ptr.vmem [resolvable:$true] %s399
          %405 = dma.hbm_to_vmem [thread:$0]  %s11, 1024, %s400, [#allocation8], 64, 64, 4
        $region56: #{tpu_custom_call.1} parent=11 // pred_fallthru
          _
        // Predicated region
        $region57: #{tpu_custom_call.1} parent=11 // pred_check
          %p406 = pneg %p302
        $region58: #{tpu_custom_call.1} parent=11 // pred_check_branch
          %408 = sbr.rel (%p406) target = $region60
        $region59: #{tpu_custom_call.1} parent=11 // pred_region
          _
        $region60: #{tpu_custom_call.1} parent=11 // pred_fallthru
          _
      $region12: #{tpu_custom_call.1} parent=5 // pred_fallthru
        _
      %p409 = scmp.lt.s32.totalorder %s24, 2
      // Predicated region
      $region61: #{tpu_custom_call.1} parent=5 // pred_check
        %p410 = pneg %p409
      $region62: #{tpu_custom_call.1} parent=5 // pred_check_branch
        %412 = sbr.rel (%p410) target = $region64
      $region63: #{tpu_custom_call.1} parent=5 // pred_region
        // Predicated region
        $region65: #{tpu_custom_call.1} parent=63 // pred_check
          %p413 = pneg %p44
        $region66: #{tpu_custom_call.1} parent=63 // pred_check_branch
          %415 = sbr.rel (%p413) target = $region68
        $region67: #{tpu_custom_call.1} parent=63 // pred_region
          %s416 = smul.u32 8, %s24
          %p417 = scmp.lt.s32.totalorder %s416, 15
          %s418 = scalar_select %p417, %s416, 15
          %s419 = smul.addr %s418, 2
          %s420 = smul.addr %s419, 8
          %s421 = scalar_lea.vmem %s0, %s420
          %s422 = smul.u32 8, %s24
        $region68: #{tpu_custom_call.1} parent=63 // pred_fallthru
          _
      $region64: #{tpu_custom_call.1} parent=5 // pred_fallthru
        _
      %p423 = scmp.le.s32.totalorder 1, %s24
      %p424 = scmp.lt.s32.totalorder %s24, 3
      %p425 = pnand %p423, %p424
      %p426 = pneg %p425
      // Predicated region
      $region69: #{tpu_custom_call.1} parent=5 // pred_check
        _
      $region70: #{tpu_custom_call.1} parent=5 // pred_check_branch
        %428 = sbr.rel (%p425) target = $region72
      $region71: #{tpu_custom_call.1} parent=5 // pred_region
        %s429 = ssub.s32 %s24, 1
        // Predicated region
        $region73: #{tpu_custom_call.1} parent=71 // pred_check
          %p430 = pneg %p197
        $region74: #{tpu_custom_call.1} parent=71 // pred_check_branch
          %432 = sbr.rel (%p430) target = $region76
        $region75: #{tpu_custom_call.1} parent=71 // pred_region
          %433 = dma.done [#allocation5], 2048
        $region76: #{tpu_custom_call.1} parent=71 // pred_fallthru
          _
        // Predicated region
        $region77: #{tpu_custom_call.1} parent=71 // pred_check
          %p434 = pneg %p239
        $region78: #{tpu_custom_call.1} parent=71 // pred_check_branch
          %436 = sbr.rel (%p434) target = $region80
        $region79: #{tpu_custom_call.1} parent=71 // pred_region
          %437 = dma.done [#allocation8], 2048
        $region80: #{tpu_custom_call.1} parent=71 // pred_fallthru
          _
        // Predicated region
        $region81: #{tpu_custom_call.1} parent=71 // pred_check
          %p438 = pneg %p281
        $region82: #{tpu_custom_call.1} parent=71 // pred_check_branch
          %440 = sbr.rel (%p438) target = $region84
        $region83: #{tpu_custom_call.1} parent=71 // pred_region
          %441 = dma.done [#allocation8], 1024
        $region84: #{tpu_custom_call.1} parent=71 // pred_fallthru
          _
        %s442 = smul.u32 8, %s29
        %p443 = scmp.lt.s32.totalorder %s442, 15
        %s444 = scalar_select %p443, %s442, 15
        %s445 = smul.addr %s444, 2
        %s446 = smul.addr %s445, 8
        %s447 = scalar_lea.vmem %s0, %s446
        %p448 = pneg %p50
        %p449 = pneg %p47
        %p450 = pneg %p71
        %p451 = pneg %p68
        %p452 = pneg %p92
        %p453 = pneg %p89
        %p454 = pneg %p113
        %p455 = pneg %p110
        %p456 = pneg %p134
        %p457 = pneg %p131
        %p458 = pneg %p155
        %p459 = pneg %p152
        %p460 = pneg %p176
        %p461 = pneg %p173
        %p462 = pneg %p197
        %p463 = pneg %p194
        %p464 = pneg %p218
        %p465 = pneg %p215
        %p466 = pneg %p239
        %p467 = pneg %p236
        %p468 = pneg %p260
        %p469 = pneg %p257
        %p470 = pneg %p281
        %p471 = pneg %p278
        %p472 = pneg %p302
        %p473 = pneg %p299
        %p474 = pneg %p328
        %p475 = pneg %p325
        %s476 = sand.u32 %s315, 1
        %s477 = scalar_lea.sflag [#allocation6], %s476
        %s478 = sand.u32 %s315, 1
        %s479 = smul.addr %s478, 8
        %s480 = scalar_lea.vmem [#allocation10], %s479
        %s481 = smul.u32 8, %s29
        %p482 = scmp.lt.s32.totalorder %s481, 15
        %s483 = scalar_select %p482, %s481, 15
        %s484 = smul.addr %s483, 2
        %s485 = smul.addr %s484, 8
        %s486 = scalar_lea.vmem %s0, %s485
        %s487 = smul.u32 8, %s29
        %489 = vst [vmem:[#allocation2] sm:$0xff] 0.0
        %490 = vst [vmem:[#allocation2 + $0x8] sm:$0xff] 0.0
        %491 = vst [vmem:[#allocation2 + $0x10] sm:$0xff] 0.0
        %492 = vst [vmem:[#allocation2 + $0x18] sm:$0xff] 0.0
        %493 = vst [vmem:[#allocation2 + $0x20] sm:$0xff] 0.0
        %494 = vst [vmem:[#allocation2 + $0x28] sm:$0xff] 0.0
        %495 = vst [vmem:[#allocation2 + $0x30] sm:$0xff] 0.0
        %496 = vst [vmem:[#allocation2 + $0x38] sm:$0xff] 0.0
        %497 = vst [vmem:[#allocation2 + $0x40] sm:$0xff] 0.0
        %498 = vst [vmem:[#allocation2 + $0x48] sm:$0xff] 0.0
        %499 = vst [vmem:[#allocation2 + $0x50] sm:$0xff] 0.0
        %500 = vst [vmem:[#allocation2 + $0x58] sm:$0xff] 0.0
        %501 = vst [vmem:[#allocation2 + $0x60] sm:$0xff] 0.0
        %502 = vst [vmem:[#allocation2 + $0x68] sm:$0xff] 0.0
        %503 = vst [vmem:[#allocation2 + $0x70] sm:$0xff] 0.0
        %504 = vst [vmem:[#allocation2 + $0x78] sm:$0xff] 0.0
        %505 = vst [vmem:[#allocation2 + $0x80] sm:$0xff] 0.0
        %506 = vst [vmem:[#allocation2 + $0x88] sm:$0xff] 0.0
        %507 = vst [vmem:[#allocation2 + $0x90] sm:$0xff] 0.0
        %508 = vst [vmem:[#allocation2 + $0x98] sm:$0xff] 0.0
        %509 = vst [vmem:[#allocation2 + $0xa0] sm:$0xff] 0.0
        %510 = vst [vmem:[#allocation2 + $0xa8] sm:$0xff] 0.0
        %511 = vst [vmem:[#allocation2 + $0xb0] sm:$0xff] 0.0
        %512 = vst [vmem:[#allocation2 + $0xb8] sm:$0xff] 0.0
        %513 = vst [vmem:[#allocation3] sm:$0xff] 0.0
        %514 = vst [vmem:[#allocation3 + $0x18] sm:$0xff] 0.0
        %515 = vst [vmem:[#allocation3 + $0x30] sm:$0xff] 0.0
        %516 = vst [vmem:[#allocation3 + $0x48] sm:$0xff] 0.0
        %517 = vst [vmem:[#allocation3 + $0x60] sm:$0xff] 0.0
        %518 = vst [vmem:[#allocation3 + $0x78] sm:$0xff] 0.0
        %519 = vst [vmem:[#allocation3 + $0x90] sm:$0xff] 0.0
        %520 = vst [vmem:[#allocation3 + $0xa8] sm:$0xff] 0.0
        %v521 = vld [vmem:[%s486] sm:$0xff]
        %v522 = vld [vmem:[%s486 + $0x8] sm:$0xff]
        %v523 = vld [vmem:[%s486 + $0x10] sm:$0xff]
        %v524 = vld [vmem:[%s486 + $0x18] sm:$0xff]
        %v525 = vld [vmem:[%s486 + $0x20] sm:$0xff]
        %v526 = vld [vmem:[%s486 + $0x28] sm:$0xff]
        %v527 = vld [vmem:[%s486 + $0x30] sm:$0xff]
        %v528 = vld [vmem:[%s486 + $0x38] sm:$0xff]
        %v529 = vld [vmem:[%s486 + $0x40] sm:$0xff]
        %v530 = vld [vmem:[%s486 + $0x48] sm:$0xff]
        %v531 = vld [vmem:[%s486 + $0x50] sm:$0xff]
        %v532 = vld [vmem:[%s486 + $0x58] sm:$0xff]
        %v533 = vld [vmem:[%s486 + $0x60] sm:$0xff]
        %v534 = vld [vmem:[%s486 + $0x68] sm:$0xff]
        %v535 = vld [vmem:[%s486 + $0x70] sm:$0xff]
        %v536 = vld [vmem:[%s486 + $0x78] sm:$0xff]
        %vm537 = vcmask 31744
        %538 = vst.msk [vmem:[#allocation2 + $0x8] sm:$0xff] %vm537, %v521
        %539 = vst.msk [vmem:[#allocation2 + $0x10] sm:$0xff] %vm537, %v522
        %540 = vst.msk [vmem:[#allocation2 + $0x20] sm:$0xff] %vm537, %v523
        %541 = vst.msk [vmem:[#allocation2 + $0x28] sm:$0xff] %vm537, %v524
        %542 = vst.msk [vmem:[#allocation2 + $0x38] sm:$0xff] %vm537, %v525
        %543 = vst.msk [vmem:[#allocation2 + $0x40] sm:$0xff] %vm537, %v526
        %544 = vst.msk [vmem:[#allocation2 + $0x50] sm:$0xff] %vm537, %v527
        %545 = vst.msk [vmem:[#allocation2 + $0x58] sm:$0xff] %vm537, %v528
        %546 = vst.msk [vmem:[#allocation2 + $0x68] sm:$0xff] %vm537, %v529
        %547 = vst.msk [vmem:[#allocation2 + $0x70] sm:$0xff] %vm537, %v530
        %548 = vst.msk [vmem:[#allocation2 + $0x80] sm:$0xff] %vm537, %v531
        %549 = vst.msk [vmem:[#allocation2 + $0x88] sm:$0xff] %vm537, %v532
        %550 = vst.msk [vmem:[#allocation2 + $0x98] sm:$0xff] %vm537, %v533
        %551 = vst.msk [vmem:[#allocation2 + $0xa0] sm:$0xff] %vm537, %v534
        %552 = vst.msk [vmem:[#allocation2 + $0xb0] sm:$0xff] %vm537, %v535
        %553 = vst.msk [vmem:[#allocation2 + $0xb8] sm:$0xff] %vm537, %v536
        %v554 = vld [vmem:[#allocation2 + $0x8] sm:$0xff]
        %v555 = vld [vmem:[#allocation2 + $0x10] sm:$0xff]
        %v556 = vld [vmem:[#allocation2 + $0x20] sm:$0xff]
        %v557 = vld [vmem:[#allocation2 + $0x28] sm:$0xff]
        %v558 = vld [vmem:[#allocation2 + $0x38] sm:$0xff]
        %v559 = vld [vmem:[#allocation2 + $0x40] sm:$0xff]
        %v560 = vld [vmem:[#allocation2 + $0x50] sm:$0xff]
        %v561 = vld [vmem:[#allocation2 + $0x58] sm:$0xff]
        %v562 = vld [vmem:[#allocation2 + $0x68] sm:$0xff]
        %v563 = vld [vmem:[#allocation2 + $0x70] sm:$0xff]
        %v564 = vld [vmem:[#allocation2 + $0x80] sm:$0xff]
        %v565 = vld [vmem:[#allocation2 + $0x88] sm:$0xff]
        %v566 = vld [vmem:[#allocation2 + $0x98] sm:$0xff]
        %v567 = vld [vmem:[#allocation2 + $0xa0] sm:$0xff]
        %v568 = vld [vmem:[#allocation2 + $0xb0] sm:$0xff]
        %v569 = vld [vmem:[#allocation2 + $0xb8] sm:$0xff]
        %v570 = vpack.c.bf16 %v555, %v554
        %v571 = vpack.c.bf16 %v557, %v556
        %v572 = vpack.c.bf16 %v559, %v558
        %v573 = vpack.c.bf16 %v561, %v560
        %v574 = vpack.c.bf16 %v563, %v562
        %v575 = vpack.c.bf16 %v565, %v564
        %v576 = vpack.c.bf16 %v567, %v566
        %v577 = vpack.c.bf16 %v569, %v568
        %v578 = vld [vmem:[#allocation2 + $0x7] sm:$0xff]
        %v579 = vld [vmem:[#allocation2 + $0xf] sm:$0xff]
        %v580 = vld [vmem:[#allocation2 + $0x1f] sm:$0xff]
        %v581 = vld [vmem:[#allocation2 + $0x27] sm:$0xff]
        %v582 = vld [vmem:[#allocation2 + $0x37] sm:$0xff]
        %v583 = vld [vmem:[#allocation2 + $0x3f] sm:$0xff]
        %v584 = vld [vmem:[#allocation2 + $0x4f] sm:$0xff]
        %v585 = vld [vmem:[#allocation2 + $0x57] sm:$0xff]
        %v586 = vld [vmem:[#allocation2 + $0x67] sm:$0xff]
        %v587 = vld [vmem:[#allocation2 + $0x6f] sm:$0xff]
        %v588 = vld [vmem:[#allocation2 + $0x7f] sm:$0xff]
        %v589 = vld [vmem:[#allocation2 + $0x87] sm:$0xff]
        %v590 = vld [vmem:[#allocation2 + $0x97] sm:$0xff]
        %v591 = vld [vmem:[#allocation2 + $0x9f] sm:$0xff]
        %v592 = vld [vmem:[#allocation2 + $0xaf] sm:$0xff]
        %v593 = vld [vmem:[#allocation2 + $0xb7] sm:$0xff]
        %v594 = vpack.c.bf16 %v579, %v578
        %v595 = vpack.c.bf16 %v581, %v580
        %v596 = vpack.c.bf16 %v583, %v582
        %v597 = vpack.c.bf16 %v585, %v584
        %v598 = vpack.c.bf16 %v587, %v586
        %v599 = vpack.c.bf16 %v589, %v588
        %v600 = vpack.c.bf16 %v591, %v590
        %v601 = vpack.c.bf16 %v593, %v592
        %v602 = vld [vmem:[%s1] sm:$0xf]
        %v603 = vld [vmem:[%s1 + $0x4] sm:$0xf]
        %v604 = vld [vmem:[%s1 + $0x8] sm:$0xf]
        %v605 = vld [vmem:[%s1 + $0xc] sm:$0xf]
        %v606 = vld [vmem:[%s1 + $0x10] sm:$0xf]
        %v607 = vld [vmem:[%s1 + $0x14] sm:$0xf]
        %v608 = vld [vmem:[%s1 + $0x18] sm:$0xf]
        %v609 = vld [vmem:[%s1 + $0x1c] sm:$0xf]
        %v610 = vld [vmem:[%s1 + $0x20] sm:$0xf]
        %v611 = vld [vmem:[%s1 + $0x24] sm:$0xf]
        %v612 = vld [vmem:[%s1 + $0x28] sm:$0xf]
        %v613 = vld [vmem:[%s1 + $0x2c] sm:$0xf]
        %v614 = vld [vmem:[%s1 + $0x30] sm:$0xf]
        %v615 = vld [vmem:[%s1 + $0x34] sm:$0xf]
        %v616 = vld [vmem:[%s1 + $0x38] sm:$0xf]
        %v617 = vld [vmem:[%s1 + $0x3c] sm:$0xf]
        %v618 = vld [vmem:[%s1 + $0x40] sm:$0xf]
        %v619 = vld [vmem:[%s1 + $0x44] sm:$0xf]
        %v620 = vld [vmem:[%s1 + $0x48] sm:$0xf]
        %v621 = vld [vmem:[%s1 + $0x4c] sm:$0xf]
        %v622 = vld [vmem:[%s1 + $0x50] sm:$0xf]
        %v623 = vld [vmem:[%s1 + $0x54] sm:$0xf]
        %v624 = vld [vmem:[%s1 + $0x58] sm:$0xf]
        %v625 = vld [vmem:[%s1 + $0x5c] sm:$0xf]
        %v626 = vld [vmem:[%s1 + $0x60] sm:$0xf]
        %v627 = vld [vmem:[%s1 + $0x64] sm:$0xf]
        %v628 = vld [vmem:[%s1 + $0x68] sm:$0xf]
        %v629 = vld [vmem:[%s1 + $0x6c] sm:$0xf]
        %v630 = vld [vmem:[%s1 + $0x70] sm:$0xf]
        %v631 = vld [vmem:[%s1 + $0x74] sm:$0xf]
        %v632 = vld [vmem:[%s1 + $0x78] sm:$0xf]
        %v633 = vld [vmem:[%s1 + $0x7c] sm:$0xf]
        %v634 = vld [vmem:[%s2] sm:$0x1]
        %v636 = vlaneseq
        %v637 = vshrl.u32 %v636, 7
        %v638 = vsub.s32 0, %v637
        %v639 = vrot.slane %v634, %v638
        %v673 = vunpack.c.l.b16 %v602
        %v674 = vunpack.c.l.b16 %v603
        %v675 = vunpack.c.l.b16 %v604
        %v676 = vunpack.c.l.b16 %v605
        %v677 = vunpack.c.l.b16 %v606
        %v678 = vunpack.c.l.b16 %v607
        %v679 = vunpack.c.l.b16 %v608
        %v680 = vunpack.c.l.b16 %v609
        %v681 = vunpack.c.l.b16 %v610
        %v682 = vunpack.c.l.b16 %v611
        %v683 = vunpack.c.l.b16 %v612
        %v684 = vunpack.c.l.b16 %v613
        %v685 = vunpack.c.l.b16 %v614
        %v686 = vunpack.c.l.b16 %v615
        %v687 = vunpack.c.l.b16 %v616
        %v688 = vunpack.c.l.b16 %v617
        %v689 = vunpack.c.l.b16 %v618
        %v690 = vunpack.c.l.b16 %v619
        %v691 = vunpack.c.l.b16 %v620
        %v692 = vunpack.c.l.b16 %v621
        %v693 = vunpack.c.l.b16 %v622
        %v694 = vunpack.c.l.b16 %v623
        %v695 = vunpack.c.l.b16 %v624
        %v696 = vunpack.c.l.b16 %v625
        %v697 = vunpack.c.l.b16 %v626
        %v698 = vunpack.c.l.b16 %v627
        %v699 = vunpack.c.l.b16 %v628
        %v700 = vunpack.c.l.b16 %v629
        %v701 = vunpack.c.l.b16 %v630
        %v702 = vunpack.c.l.b16 %v631
        %v703 = vunpack.c.l.b16 %v632
        %v704 = vunpack.c.l.b16 %v633
        %v705 = vpack.c.b16 %v674, %v673
        %v706 = vpack.c.b16 %v676, %v675
        %v707 = vpack.c.b16 %v678, %v677
        %v708 = vpack.c.b16 %v680, %v679
        %v709 = vpack.c.b16 %v682, %v681
        %v710 = vpack.c.b16 %v684, %v683
        %v711 = vpack.c.b16 %v686, %v685
        %v712 = vpack.c.b16 %v688, %v687
        %v713 = vpack.c.b16 %v690, %v689
        %v714 = vpack.c.b16 %v692, %v691
        %v715 = vpack.c.b16 %v694, %v693
        %v716 = vpack.c.b16 %v696, %v695
        %v717 = vpack.c.b16 %v698, %v697
        %v718 = vpack.c.b16 %v700, %v699
        %v719 = vpack.c.b16 %v702, %v701
        %v720 = vpack.c.b16 %v704, %v703
        %737 = vmatprep.subr.bf16.mxu0 0
        %738 = vmatpush1.bf16.msra.mxu0 %v712
        %739 = vmatprep.subr.bf16.mxu0 0
        %740 = vmatpush1.bf16.msra.mxu0 %v711
        %741 = vmatprep.subr.bf16.mxu0 0
        %742 = vmatpush1.bf16.msra.mxu0 %v710
        %743 = vmatprep.subr.bf16.mxu0 0
        %744 = vmatpush1.bf16.msra.mxu0 %v709
        %745 = vmatprep.subr.bf16.mxu0 0
        %746 = vmatpush1.bf16.msra.mxu0 %v708
        %747 = vmatprep.subr.bf16.mxu0 0
        %748 = vmatpush1.bf16.msra.mxu0 %v707
        %749 = vmatprep.subr.bf16.mxu0 0
        %750 = vmatpush1.bf16.msra.mxu0 %v706
        %751 = vmatprep.subr.bf16.mxu0 0
        %752 = vmatpush1.bf16.msra.mxu0 %v705
        %753 = vmatprep.subr.bf16.mxu0 0
        %754 = vmatpush2.bf16.msra.mxu0 %v720
        %755 = vmatprep.subr.bf16.mxu0 0
        %756 = vmatpush2.bf16.msra.mxu0 %v719
        %757 = vmatprep.subr.bf16.mxu0 0
        %758 = vmatpush2.bf16.msra.mxu0 %v718
        %759 = vmatprep.subr.bf16.mxu0 0
        %760 = vmatpush2.bf16.msra.mxu0 %v717
        %761 = vmatprep.subr.bf16.mxu0 0
        %762 = vmatpush2.bf16.msra.mxu0 %v716
        %763 = vmatprep.subr.bf16.mxu0 0
        %764 = vmatpush2.bf16.msra.mxu0 %v715
        %765 = vmatprep.subr.bf16.mxu0 0
        %766 = vmatpush2.bf16.msra.mxu0 %v714
        %767 = vmatprep.subr.bf16.mxu0 0
        %768 = vmatpush2.bf16.msra.mxu0 %v713
        %769 = vmatprep.mubr.bf16.mxu0 %v570
        %770 = vmatmul.mubr.bf16.gmra.mxu0 %v594
        %v771 = vpop.f32.mrf.mxu0
        %v772 = vadd.f32 %v639, %v771
        %v773 = vpop.f32.mrf.mxu0
        %v774 = vpop.f32.mrf.mxu0
        %v775 = vadd.f32 %v639, %v774
        %v776 = vpop.f32.mrf.mxu0
        %777 = vmatprep.mubr.bf16.mxu0 %v571
        %778 = vmatmul.mubr.bf16.gmra.mxu0 %v595
        %v779 = vpop.f32.mrf.mxu0
        %v780 = vadd.f32 %v639, %v779
        %v781 = vpop.f32.mrf.mxu0
        %v782 = vpop.f32.mrf.mxu0
        %v783 = vadd.f32 %v639, %v782
        %v784 = vpop.f32.mrf.mxu0
        %785 = vmatprep.mubr.bf16.mxu0 %v572
        %786 = vmatmul.mubr.bf16.gmra.mxu0 %v596
        %v787 = vpop.f32.mrf.mxu0
        %v788 = vadd.f32 %v639, %v787
        %v789 = vpop.f32.mrf.mxu0
        %v790 = vpop.f32.mrf.mxu0
        %v791 = vadd.f32 %v639, %v790
        %v792 = vpop.f32.mrf.mxu0
        %793 = vmatprep.mubr.bf16.mxu0 %v573
        %794 = vmatmul.mubr.bf16.gmra.mxu0 %v597
        %v795 = vpop.f32.mrf.mxu0
        %v796 = vadd.f32 %v639, %v795
        %v797 = vpop.f32.mrf.mxu0
        %v798 = vpop.f32.mrf.mxu0
        %v799 = vadd.f32 %v639, %v798
        %v800 = vpop.f32.mrf.mxu0
        %801 = vmatprep.mubr.bf16.mxu0 %v574
        %802 = vmatmul.mubr.bf16.gmra.mxu0 %v598
        %v803 = vpop.f32.mrf.mxu0
        %v804 = vadd.f32 %v639, %v803
        %v805 = vpop.f32.mrf.mxu0
        %v806 = vpop.f32.mrf.mxu0
        %v807 = vadd.f32 %v639, %v806
        %v808 = vpop.f32.mrf.mxu0
        %809 = vmatprep.mubr.bf16.mxu0 %v575
        %810 = vmatmul.mubr.bf16.gmra.mxu0 %v599
        %v811 = vpop.f32.mrf.mxu0
        %v812 = vadd.f32 %v639, %v811
        %v813 = vpop.f32.mrf.mxu0
        %v814 = vpop.f32.mrf.mxu0
        %v815 = vadd.f32 %v639, %v814
        %v816 = vpop.f32.mrf.mxu0
        %817 = vmatprep.mubr.bf16.mxu0 %v576
        %818 = vmatmul.mubr.bf16.gmra.mxu0 %v600
        %v819 = vpop.f32.mrf.mxu0
        %v820 = vadd.f32 %v639, %v819
        %v821 = vpop.f32.mrf.mxu0
        %v822 = vpop.f32.mrf.mxu0
        %v823 = vadd.f32 %v639, %v822
        %v824 = vpop.f32.mrf.mxu0
        %825 = vmatprep.mubr.bf16.mxu0 %v577
        %826 = vmatmul.mubr.bf16.gmra.mxu0 %v601
        %v827 = vpop.f32.mrf.mxu0
        %v828 = vadd.f32 %v639, %v827
        %v829 = vpop.f32.mrf.mxu0
        %v830 = vpop.f32.mrf.mxu0
        %v831 = vadd.f32 %v639, %v830
        %v832 = vpop.f32.mrf.mxu0
        %833 = vdwg.mxu0
        %v834 = vmax.f32 %v772, 0.0
        %v835 = vmax.f32 %v775, 0.0
        %v836 = vmax.f32 %v780, 0.0
        %v837 = vmax.f32 %v783, 0.0
        %v838 = vmax.f32 %v788, 0.0
        %v839 = vmax.f32 %v791, 0.0
        %v840 = vmax.f32 %v796, 0.0
        %v841 = vmax.f32 %v799, 0.0
        %v842 = vmax.f32 %v804, 0.0
        %v843 = vmax.f32 %v807, 0.0
        %v844 = vmax.f32 %v812, 0.0
        %v845 = vmax.f32 %v815, 0.0
        %v846 = vmax.f32 %v820, 0.0
        %v847 = vmax.f32 %v823, 0.0
        %v848 = vmax.f32 %v828, 0.0
        %v849 = vmax.f32 %v831, 0.0
        %850 = vst [vmem:[#allocation3 + $0x8] sm:$0xff] %v834
        %851 = vst [vmem:[#allocation3 + $0x10] sm:$0xff] %v835
        %852 = vst [vmem:[#allocation3 + $0x20] sm:$0xff] %v836
        %853 = vst [vmem:[#allocation3 + $0x28] sm:$0xff] %v837
        %854 = vst [vmem:[#allocation3 + $0x38] sm:$0xff] %v838
        %855 = vst [vmem:[#allocation3 + $0x40] sm:$0xff] %v839
        %856 = vst [vmem:[#allocation3 + $0x50] sm:$0xff] %v840
        %857 = vst [vmem:[#allocation3 + $0x58] sm:$0xff] %v841
        %858 = vst [vmem:[#allocation3 + $0x68] sm:$0xff] %v842
        %859 = vst [vmem:[#allocation3 + $0x70] sm:$0xff] %v843
        %860 = vst [vmem:[#allocation3 + $0x80] sm:$0xff] %v844
        %861 = vst [vmem:[#allocation3 + $0x88] sm:$0xff] %v845
        %862 = vst [vmem:[#allocation3 + $0x98] sm:$0xff] %v846
        %863 = vst [vmem:[#allocation3 + $0xa0] sm:$0xff] %v847
        %864 = vst [vmem:[#allocation3 + $0xb0] sm:$0xff] %v848
        %865 = vst [vmem:[#allocation3 + $0xb8] sm:$0xff] %v849
        %v866 = vpack.c.bf16 %v835, %v834
        %v867 = vpack.c.bf16 %v837, %v836
        %v868 = vpack.c.bf16 %v839, %v838
        %v869 = vpack.c.bf16 %v841, %v840
        %v870 = vpack.c.bf16 %v843, %v842
        %v871 = vpack.c.bf16 %v845, %v844
        %v872 = vpack.c.bf16 %v847, %v846
        %v873 = vpack.c.bf16 %v849, %v848
        %v874 = vld [vmem:[#allocation3 + $0x7] sm:$0xff]
        %v875 = vld [vmem:[#allocation3 + $0xf] sm:$0xff]
        %v876 = vld [vmem:[#allocation3 + $0x1f] sm:$0xff]
        %v877 = vld [vmem:[#allocation3 + $0x27] sm:$0xff]
        %v878 = vld [vmem:[#allocation3 + $0x37] sm:$0xff]
        %v879 = vld [vmem:[#allocation3 + $0x3f] sm:$0xff]
        %v880 = vld [vmem:[#allocation3 + $0x4f] sm:$0xff]
        %v881 = vld [vmem:[#allocation3 + $0x57] sm:$0xff]
        %v882 = vld [vmem:[#allocation3 + $0x67] sm:$0xff]
        %v883 = vld [vmem:[#allocation3 + $0x6f] sm:$0xff]
        %v884 = vld [vmem:[#allocation3 + $0x7f] sm:$0xff]
        %v885 = vld [vmem:[#allocation3 + $0x87] sm:$0xff]
        %v886 = vld [vmem:[#allocation3 + $0x97] sm:$0xff]
        %v887 = vld [vmem:[#allocation3 + $0x9f] sm:$0xff]
        %v888 = vld [vmem:[#allocation3 + $0xaf] sm:$0xff]
        %v889 = vld [vmem:[#allocation3 + $0xb7] sm:$0xff]
        %v890 = vpack.c.bf16 %v875, %v874
        %v891 = vpack.c.bf16 %v877, %v876
        %v892 = vpack.c.bf16 %v879, %v878
        %v893 = vpack.c.bf16 %v881, %v880
        %v894 = vpack.c.bf16 %v883, %v882
        %v895 = vpack.c.bf16 %v885, %v884
        %v896 = vpack.c.bf16 %v887, %v886
        %v897 = vpack.c.bf16 %v889, %v888
        %v898 = vld [vmem:[%s3] sm:$0xf]
        %v899 = vld [vmem:[%s3 + $0x4] sm:$0xf]
        %v900 = vld [vmem:[%s3 + $0x8] sm:$0xf]
        %v901 = vld [vmem:[%s3 + $0xc] sm:$0xf]
        %v902 = vld [vmem:[%s3 + $0x10] sm:$0xf]
        %v903 = vld [vmem:[%s3 + $0x14] sm:$0xf]
        %v904 = vld [vmem:[%s3 + $0x18] sm:$0xf]
        %v905 = vld [vmem:[%s3 + $0x1c] sm:$0xf]
        %v906 = vld [vmem:[%s3 + $0x20] sm:$0xf]
        %v907 = vld [vmem:[%s3 + $0x24] sm:$0xf]
        %v908 = vld [vmem:[%s3 + $0x28] sm:$0xf]
        %v909 = vld [vmem:[%s3 + $0x2c] sm:$0xf]
        %v910 = vld [vmem:[%s3 + $0x30] sm:$0xf]
        %v911 = vld [vmem:[%s3 + $0x34] sm:$0xf]
        %v912 = vld [vmem:[%s3 + $0x38] sm:$0xf]
        %v913 = vld [vmem:[%s3 + $0x3c] sm:$0xf]
        %v914 = vld [vmem:[%s3 + $0x40] sm:$0xf]
        %v915 = vld [vmem:[%s3 + $0x44] sm:$0xf]
        %v916 = vld [vmem:[%s3 + $0x48] sm:$0xf]
        %v917 = vld [vmem:[%s3 + $0x4c] sm:$0xf]
        %v918 = vld [vmem:[%s3 + $0x50] sm:$0xf]
        %v919 = vld [vmem:[%s3 + $0x54] sm:$0xf]
        %v920 = vld [vmem:[%s3 + $0x58] sm:$0xf]
        %v921 = vld [vmem:[%s3 + $0x5c] sm:$0xf]
        %v922 = vld [vmem:[%s3 + $0x60] sm:$0xf]
        %v923 = vld [vmem:[%s3 + $0x64] sm:$0xf]
        %v924 = vld [vmem:[%s3 + $0x68] sm:$0xf]
        %v925 = vld [vmem:[%s3 + $0x6c] sm:$0xf]
        %v926 = vld [vmem:[%s3 + $0x70] sm:$0xf]
        %v927 = vld [vmem:[%s3 + $0x74] sm:$0xf]
        %v928 = vld [vmem:[%s3 + $0x78] sm:$0xf]
        %v929 = vld [vmem:[%s3 + $0x7c] sm:$0xf]
        %v930 = vld [vmem:[%s4] sm:$0x1]
        %v932 = vlaneseq
        %v933 = vshrl.u32 %v932, 7
        %v934 = vsub.s32 0, %v933
        %v935 = vrot.slane %v930, %v934
        %v969 = vunpack.c.l.b16 %v898
        %v970 = vunpack.c.l.b16 %v899
        %v971 = vunpack.c.l.b16 %v900
        %v972 = vunpack.c.l.b16 %v901
        %v973 = vunpack.c.l.b16 %v902
        %v974 = vunpack.c.l.b16 %v903
        %v975 = vunpack.c.l.b16 %v904
        %v976 = vunpack.c.l.b16 %v905
        %v977 = vunpack.c.l.b16 %v906
        %v978 = vunpack.c.l.b16 %v907
        %v979 = vunpack.c.l.b16 %v908
        %v980 = vunpack.c.l.b16 %v909
        %v981 = vunpack.c.l.b16 %v910
        %v982 = vunpack.c.l.b16 %v911
        %v983 = vunpack.c.l.b16 %v912
        %v984 = vunpack.c.l.b16 %v913
        %v985 = vunpack.c.l.b16 %v914
        %v986 = vunpack.c.l.b16 %v915
        %v987 = vunpack.c.l.b16 %v916
        %v988 = vunpack.c.l.b16 %v917
        %v989 = vunpack.c.l.b16 %v918
        %v990 = vunpack.c.l.b16 %v919
        %v991 = vunpack.c.l.b16 %v920
        %v992 = vunpack.c.l.b16 %v921
        %v993 = vunpack.c.l.b16 %v922
        %v994 = vunpack.c.l.b16 %v923
        %v995 = vunpack.c.l.b16 %v924
        %v996 = vunpack.c.l.b16 %v925
        %v997 = vunpack.c.l.b16 %v926
        %v998 = vunpack.c.l.b16 %v927
        %v999 = vunpack.c.l.b16 %v928
        %v1000 = vunpack.c.l.b16 %v929
        %v1001 = vpack.c.b16 %v970, %v969
        %v1002 = vpack.c.b16 %v972, %v971
        %v1003 = vpack.c.b16 %v974, %v973
        %v1004 = vpack.c.b16 %v976, %v975
        %v1005 = vpack.c.b16 %v978, %v977
        %v1006 = vpack.c.b16 %v980, %v979
        %v1007 = vpack.c.b16 %v982, %v981
        %v1008 = vpack.c.b16 %v984, %v983
        %v1009 = vpack.c.b16 %v986, %v985
        %v1010 = vpack.c.b16 %v988, %v987
        %v1011 = vpack.c.b16 %v990, %v989
        %v1012 = vpack.c.b16 %v992, %v991
        %v1013 = vpack.c.b16 %v994, %v993
        %v1014 = vpack.c.b16 %v996, %v995
        %v1015 = vpack.c.b16 %v998, %v997
        %v1016 = vpack.c.b16 %v1000, %v999
        %1033 = vmatprep.subr.bf16.mxu0 0
        %1034 = vmatpush1.bf16.msra.mxu0 %v1008
        %1035 = vmatprep.subr.bf16.mxu0 0
        %1036 = vmatpush1.bf16.msra.mxu0 %v1007
        %1037 = vmatprep.subr.bf16.mxu0 0
        %1038 = vmatpush1.bf16.msra.mxu0 %v1006
        %1039 = vmatprep.subr.bf16.mxu0 0
        %1040 = vmatpush1.bf16.msra.mxu0 %v1005
        %1041 = vmatprep.subr.bf16.mxu0 0
        %1042 = vmatpush1.bf16.msra.mxu0 %v1004
        %1043 = vmatprep.subr.bf16.mxu0 0
        %1044 = vmatpush1.bf16.msra.mxu0 %v1003
        %1045 = vmatprep.subr.bf16.mxu0 0
        %1046 = vmatpush1.bf16.msra.mxu0 %v1002
        %1047 = vmatprep.subr.bf16.mxu0 0
        %1048 = vmatpush1.bf16.msra.mxu0 %v1001
        %1049 = vmatprep.subr.bf16.mxu0 0
        %1050 = vmatpush2.bf16.msra.mxu0 %v1016
        %1051 = vmatprep.subr.bf16.mxu0 0
        %1052 = vmatpush2.bf16.msra.mxu0 %v1015
        %1053 = vmatprep.subr.bf16.mxu0 0
        %1054 = vmatpush2.bf16.msra.mxu0 %v1014
        %1055 = vmatprep.subr.bf16.mxu0 0
        %1056 = vmatpush2.bf16.msra.mxu0 %v1013
        %1057 = vmatprep.subr.bf16.mxu0 0
        %1058 = vmatpush2.bf16.msra.mxu0 %v1012
        %1059 = vmatprep.subr.bf16.mxu0 0
        %1060 = vmatpush2.bf16.msra.mxu0 %v1011
        %1061 = vmatprep.subr.bf16.mxu0 0
        %1062 = vmatpush2.bf16.msra.mxu0 %v1010
        %1063 = vmatprep.subr.bf16.mxu0 0
        %1064 = vmatpush2.bf16.msra.mxu0 %v1009
        %1065 = vmatprep.mubr.bf16.mxu0 %v866
        %1066 = vmatmul.mubr.bf16.gmra.mxu0 %v890
        %v1067 = vpop.f32.mrf.mxu0
        %v1068 = vadd.f32 %v935, %v1067
        %v1069 = vpop.f32.mrf.mxu0
        %v1070 = vpop.f32.mrf.mxu0
        %v1071 = vadd.f32 %v935, %v1070
        %v1072 = vpop.f32.mrf.mxu0
        %1073 = vmatprep.mubr.bf16.mxu0 %v867
        %1074 = vmatmul.mubr.bf16.gmra.mxu0 %v891
        %v1075 = vpop.f32.mrf.mxu0
        %v1076 = vadd.f32 %v935, %v1075
        %v1077 = vpop.f32.mrf.mxu0
        %v1078 = vpop.f32.mrf.mxu0
        %v1079 = vadd.f32 %v935, %v1078
        %v1080 = vpop.f32.mrf.mxu0
        %1081 = vmatprep.mubr.bf16.mxu0 %v868
        %1082 = vmatmul.mubr.bf16.gmra.mxu0 %v892
        %v1083 = vpop.f32.mrf.mxu0
        %v1084 = vadd.f32 %v935, %v1083
        %v1085 = vpop.f32.mrf.mxu0
        %v1086 = vpop.f32.mrf.mxu0
        %v1087 = vadd.f32 %v935, %v1086
        %v1088 = vpop.f32.mrf.mxu0
        %1089 = vmatprep.mubr.bf16.mxu0 %v869
        %1090 = vmatmul.mubr.bf16.gmra.mxu0 %v893
        %v1091 = vpop.f32.mrf.mxu0
        %v1092 = vadd.f32 %v935, %v1091
        %v1093 = vpop.f32.mrf.mxu0
        %v1094 = vpop.f32.mrf.mxu0
        %v1095 = vadd.f32 %v935, %v1094
        %v1096 = vpop.f32.mrf.mxu0
        %1097 = vmatprep.mubr.bf16.mxu0 %v870
        %1098 = vmatmul.mubr.bf16.gmra.mxu0 %v894
        %v1099 = vpop.f32.mrf.mxu0
        %v1100 = vadd.f32 %v935, %v1099
        %v1101 = vpop.f32.mrf.mxu0
        %v1102 = vpop.f32.mrf.mxu0
        %v1103 = vadd.f32 %v935, %v1102
        %v1104 = vpop.f32.mrf.mxu0
        %1105 = vmatprep.mubr.bf16.mxu0 %v871
        %1106 = vmatmul.mubr.bf16.gmra.mxu0 %v895
        %v1107 = vpop.f32.mrf.mxu0
        %v1108 = vadd.f32 %v935, %v1107
        %v1109 = vpop.f32.mrf.mxu0
        %v1110 = vpop.f32.mrf.mxu0
        %v1111 = vadd.f32 %v935, %v1110
        %v1112 = vpop.f32.mrf.mxu0
        %1113 = vmatprep.mubr.bf16.mxu0 %v872
        %1114 = vmatmul.mubr.bf16.gmra.mxu0 %v896
        %v1115 = vpop.f32.mrf.mxu0
        %v1116 = vadd.f32 %v935, %v1115
        %v1117 = vpop.f32.mrf.mxu0
        %v1118 = vpop.f32.mrf.mxu0
        %v1119 = vadd.f32 %v935, %v1118
        %v1120 = vpop.f32.mrf.mxu0
        %1121 = vmatprep.mubr.bf16.mxu0 %v873
        %1122 = vmatmul.mubr.bf16.gmra.mxu0 %v897
        %v1123 = vpop.f32.mrf.mxu0
        %v1124 = vadd.f32 %v935, %v1123
        %v1125 = vpop.f32.mrf.mxu0
        %v1126 = vpop.f32.mrf.mxu0
        %v1127 = vadd.f32 %v935, %v1126
        %v1128 = vpop.f32.mrf.mxu0
        %1129 = vdwg.mxu0
        %v1130 = vmax.f32 %v1068, 0.0
        %v1131 = vmax.f32 %v1071, 0.0
        %v1132 = vmax.f32 %v1076, 0.0
        %v1133 = vmax.f32 %v1079, 0.0
        %v1134 = vmax.f32 %v1084, 0.0
        %v1135 = vmax.f32 %v1087, 0.0
        %v1136 = vmax.f32 %v1092, 0.0
        %v1137 = vmax.f32 %v1095, 0.0
        %v1138 = vmax.f32 %v1100, 0.0
        %v1139 = vmax.f32 %v1103, 0.0
        %v1140 = vmax.f32 %v1108, 0.0
        %v1141 = vmax.f32 %v1111, 0.0
        %v1142 = vmax.f32 %v1116, 0.0
        %v1143 = vmax.f32 %v1119, 0.0
        %v1144 = vmax.f32 %v1124, 0.0
        %v1145 = vmax.f32 %v1127, 0.0
        %v1146 = vld [vmem:[%s5] sm:$0xf]
        %v1147 = vld [vmem:[%s5 + $0x4] sm:$0xf]
        %v1148 = vld [vmem:[%s5 + $0x8] sm:$0xf]
        %v1149 = vld [vmem:[%s5 + $0xc] sm:$0xf]
        %v1150 = vld [vmem:[%s5 + $0x10] sm:$0xf]
        %v1151 = vld [vmem:[%s5 + $0x14] sm:$0xf]
        %v1152 = vld [vmem:[%s5 + $0x18] sm:$0xf]
        %v1153 = vld [vmem:[%s5 + $0x1c] sm:$0xf]
        %v1154 = vld [vmem:[%s5 + $0x20] sm:$0xf]
        %v1155 = vld [vmem:[%s5 + $0x24] sm:$0xf]
        %v1156 = vld [vmem:[%s5 + $0x28] sm:$0xf]
        %v1157 = vld [vmem:[%s5 + $0x2c] sm:$0xf]
        %v1158 = vld [vmem:[%s5 + $0x30] sm:$0xf]
        %v1159 = vld [vmem:[%s5 + $0x34] sm:$0xf]
        %v1160 = vld [vmem:[%s5 + $0x38] sm:$0xf]
        %v1161 = vld [vmem:[%s5 + $0x3c] sm:$0xf]
        %v1162 = vld [vmem:[%s6] sm:$0x1]
        %v1164 = vlaneseq
        %v1165 = vshrl.u32 %v1164, 7
        %v1166 = vsub.s32 0, %v1165
        %v1167 = vrot.slane %v1162, %v1166
        %v1185 = vunpack.c.l.b16 %v1146
        %v1186 = vunpack.c.l.b16 %v1147
        %v1187 = vunpack.c.l.b16 %v1148
        %v1188 = vunpack.c.l.b16 %v1149
        %v1189 = vunpack.c.l.b16 %v1150
        %v1190 = vunpack.c.l.b16 %v1151
        %v1191 = vunpack.c.l.b16 %v1152
        %v1192 = vunpack.c.l.b16 %v1153
        %v1193 = vunpack.c.l.b16 %v1154
        %v1194 = vunpack.c.l.b16 %v1155
        %v1195 = vunpack.c.l.b16 %v1156
        %v1196 = vunpack.c.l.b16 %v1157
        %v1197 = vunpack.c.l.b16 %v1158
        %v1198 = vunpack.c.l.b16 %v1159
        %v1199 = vunpack.c.l.b16 %v1160
        %v1200 = vunpack.c.l.b16 %v1161
        %v1201 = vpack.c.b16 %v1186, %v1185
        %v1202 = vpack.c.b16 %v1188, %v1187
        %v1203 = vpack.c.b16 %v1190, %v1189
        %v1204 = vpack.c.b16 %v1192, %v1191
        %v1205 = vpack.c.b16 %v1194, %v1193
        %v1206 = vpack.c.b16 %v1196, %v1195
        %v1207 = vpack.c.b16 %v1198, %v1197
        %v1208 = vpack.c.b16 %v1200, %v1199
        %1217 = vmatprep.subr.bf16.mxu0 0
        %1218 = vmatpush1.bf16.msra.mxu0 %v1208
        %1219 = vmatprep.subr.bf16.mxu0 0
        %1220 = vmatpush1.bf16.msra.mxu0 %v1207
        %1221 = vmatprep.subr.bf16.mxu0 0
        %1222 = vmatpush1.bf16.msra.mxu0 %v1206
        %1223 = vmatprep.subr.bf16.mxu0 0
        %1224 = vmatpush1.bf16.msra.mxu0 %v1205
        %1225 = vmatprep.subr.bf16.mxu0 0
        %1226 = vmatpush1.bf16.msra.mxu0 %v1204
        %1227 = vmatprep.subr.bf16.mxu0 0
        %1228 = vmatpush1.bf16.msra.mxu0 %v1203
        %1229 = vmatprep.subr.bf16.mxu0 0
        %1230 = vmatpush1.bf16.msra.mxu0 %v1202
        %1231 = vmatprep.subr.bf16.mxu0 0
        %1232 = vmatpush1.bf16.msra.mxu0 %v1201
        %1233 = vmatprep.subr.bf16.mxu0 0
        %1234 = vmatpush2.bf16.msra.mxu0 0
        %1235 = vmatprep.subr.bf16.mxu0 0
        %1236 = vmatpush2.bf16.msra.mxu0 0
        %1237 = vmatprep.subr.bf16.mxu0 0
        %1238 = vmatpush2.bf16.msra.mxu0 0
        %1239 = vmatprep.subr.bf16.mxu0 0
        %1240 = vmatpush2.bf16.msra.mxu0 0
        %1241 = vmatprep.subr.bf16.mxu0 0
        %1242 = vmatpush2.bf16.msra.mxu0 0
        %1243 = vmatprep.subr.bf16.mxu0 0
        %1244 = vmatpush2.bf16.msra.mxu0 0
        %1245 = vmatprep.subr.bf16.mxu0 0
        %1246 = vmatpush2.bf16.msra.mxu0 0
        %1247 = vmatprep.subr.bf16.mxu0 0
        %1248 = vmatpush2.bf16.msra.mxu0 0
        %1249 = vmatprep.mubr.bf16.mxu0 0
        %1250 = vmatmul.mubr.bf16.gmra.mxu0 %v570
        %v1251 = vpop.f32.mrf.mxu0
        %v1252 = vadd.f32 %v1167, %v1251
        %v1253 = vpop.f32.mrf.mxu0
        %v1254 = vpop.f32.mrf.mxu0
        %v1255 = vadd.f32 %v1167, %v1254
        %v1256 = vpop.f32.mrf.mxu0
        %1257 = vmatprep.mubr.bf16.mxu0 0
        %1258 = vmatmul.mubr.bf16.gmra.mxu0 %v571
        %v1259 = vpop.f32.mrf.mxu0
        %v1260 = vadd.f32 %v1167, %v1259
        %v1261 = vpop.f32.mrf.mxu0
        %v1262 = vpop.f32.mrf.mxu0
        %v1263 = vadd.f32 %v1167, %v1262
        %v1264 = vpop.f32.mrf.mxu0
        %1265 = vmatprep.mubr.bf16.mxu0 0
        %1266 = vmatmul.mubr.bf16.gmra.mxu0 %v572
        %v1267 = vpop.f32.mrf.mxu0
        %v1268 = vadd.f32 %v1167, %v1267
        %v1269 = vpop.f32.mrf.mxu0
        %v1270 = vpop.f32.mrf.mxu0
        %v1271 = vadd.f32 %v1167, %v1270
        %v1272 = vpop.f32.mrf.mxu0
        %1273 = vmatprep.mubr.bf16.mxu0 0
        %1274 = vmatmul.mubr.bf16.gmra.mxu0 %v573
        %v1275 = vpop.f32.mrf.mxu0
        %v1276 = vadd.f32 %v1167, %v1275
        %v1277 = vpop.f32.mrf.mxu0
        %v1278 = vpop.f32.mrf.mxu0
        %v1279 = vadd.f32 %v1167, %v1278
        %v1280 = vpop.f32.mrf.mxu0
        %1281 = vmatprep.mubr.bf16.mxu0 0
        %1282 = vmatmul.mubr.bf16.gmra.mxu0 %v574
        %v1283 = vpop.f32.mrf.mxu0
        %v1284 = vadd.f32 %v1167, %v1283
        %v1285 = vpop.f32.mrf.mxu0
        %v1286 = vpop.f32.mrf.mxu0
        %v1287 = vadd.f32 %v1167, %v1286
        %v1288 = vpop.f32.mrf.mxu0
        %1289 = vmatprep.mubr.bf16.mxu0 0
        %1290 = vmatmul.mubr.bf16.gmra.mxu0 %v575
        %v1291 = vpop.f32.mrf.mxu0
        %v1292 = vadd.f32 %v1167, %v1291
        %v1293 = vpop.f32.mrf.mxu0
        %v1294 = vpop.f32.mrf.mxu0
        %v1295 = vadd.f32 %v1167, %v1294
        %v1296 = vpop.f32.mrf.mxu0
        %1297 = vmatprep.mubr.bf16.mxu0 0
        %1298 = vmatmul.mubr.bf16.gmra.mxu0 %v576
        %v1299 = vpop.f32.mrf.mxu0
        %v1300 = vadd.f32 %v1167, %v1299
        %v1301 = vpop.f32.mrf.mxu0
        %v1302 = vpop.f32.mrf.mxu0
        %v1303 = vadd.f32 %v1167, %v1302
        %v1304 = vpop.f32.mrf.mxu0
        %1305 = vmatprep.mubr.bf16.mxu0 0
        %1306 = vmatmul.mubr.bf16.gmra.mxu0 %v577
        %v1307 = vpop.f32.mrf.mxu0
        %v1308 = vadd.f32 %v1167, %v1307
        %v1309 = vpop.f32.mrf.mxu0
        %v1310 = vpop.f32.mrf.mxu0
        %v1311 = vadd.f32 %v1167, %v1310
        %v1312 = vpop.f32.mrf.mxu0
        %1313 = vdwg.mxu0
        %v1314 = vadd.f32 %v1130, %v1252
        %v1315 = vadd.f32 %v1131, %v1255
        %v1316 = vadd.f32 %v1132, %v1260
        %v1317 = vadd.f32 %v1133, %v1263
        %v1318 = vadd.f32 %v1134, %v1268
        %v1319 = vadd.f32 %v1135, %v1271
        %v1320 = vadd.f32 %v1136, %v1276
        %v1321 = vadd.f32 %v1137, %v1279
        %v1322 = vadd.f32 %v1138, %v1284
        %v1323 = vadd.f32 %v1139, %v1287
        %v1324 = vadd.f32 %v1140, %v1292
        %v1325 = vadd.f32 %v1141, %v1295
        %v1326 = vadd.f32 %v1142, %v1300
        %v1327 = vadd.f32 %v1143, %v1303
        %v1328 = vadd.f32 %v1144, %v1308
        %v1329 = vadd.f32 %v1145, %v1311
        %v1330 = vmax.f32 %v1314, 0.0
        %v1331 = vmax.f32 %v1315, 0.0
        %v1332 = vmax.f32 %v1316, 0.0
        %v1333 = vmax.f32 %v1317, 0.0
        %v1334 = vmax.f32 %v1318, 0.0
        %v1335 = vmax.f32 %v1319, 0.0
        %v1336 = vmax.f32 %v1320, 0.0
        %v1337 = vmax.f32 %v1321, 0.0
        %v1338 = vmax.f32 %v1322, 0.0
        %v1339 = vmax.f32 %v1323, 0.0
        %v1340 = vmax.f32 %v1324, 0.0
        %v1341 = vmax.f32 %v1325, 0.0
        %v1342 = vmax.f32 %v1326, 0.0
        %v1343 = vmax.f32 %v1327, 0.0
        %v1344 = vmax.f32 %v1328, 0.0
        %v1345 = vmax.f32 %v1329, 0.0
        %1346 = vst [vmem:[#allocation2 + $0x8] sm:$0xff] %v1330
        %1347 = vst [vmem:[#allocation2 + $0x10] sm:$0xff] %v1331
        %1348 = vst [vmem:[#allocation2 + $0x20] sm:$0xff] %v1332
        %1349 = vst [vmem:[#allocation2 + $0x28] sm:$0xff] %v1333
        %1350 = vst [vmem:[#allocation2 + $0x38] sm:$0xff] %v1334
        %1351 = vst [vmem:[#allocation2 + $0x40] sm:$0xff] %v1335
        %1352 = vst [vmem:[#allocation2 + $0x50] sm:$0xff] %v1336
        %1353 = vst [vmem:[#allocation2 + $0x58] sm:$0xff] %v1337
        %1354 = vst [vmem:[#allocation2 + $0x68] sm:$0xff] %v1338
        %1355 = vst [vmem:[#allocation2 + $0x70] sm:$0xff] %v1339
        %1356 = vst [vmem:[#allocation2 + $0x80] sm:$0xff] %v1340
        %1357 = vst [vmem:[#allocation2 + $0x88] sm:$0xff] %v1341
        %1358 = vst [vmem:[#allocation2 + $0x98] sm:$0xff] %v1342
        %1359 = vst [vmem:[#allocation2 + $0xa0] sm:$0xff] %v1343
        %1360 = vst [vmem:[#allocation2 + $0xb0] sm:$0xff] %v1344
        %1361 = vst [vmem:[#allocation2 + $0xb8] sm:$0xff] %v1345
        %v1362 = vpack.c.bf16 %v1331, %v1330
        %v1363 = vpack.c.bf16 %v1333, %v1332
        %v1364 = vpack.c.bf16 %v1335, %v1334
        %v1365 = vpack.c.bf16 %v1337, %v1336
        %v1366 = vpack.c.bf16 %v1339, %v1338
        %v1367 = vpack.c.bf16 %v1341, %v1340
        %v1368 = vpack.c.bf16 %v1343, %v1342
        %v1369 = vpack.c.bf16 %v1345, %v1344
        %v1370 = vld [vmem:[#allocation2 + $0x6] sm:$0xff]
        %v1371 = vld [vmem:[#allocation2 + $0xe] sm:$0xff]
        %v1372 = vld [vmem:[#allocation2 + $0x1e] sm:$0xff]
        %v1373 = vld [vmem:[#allocation2 + $0x26] sm:$0xff]
        %v1374 = vld [vmem:[#allocation2 + $0x36] sm:$0xff]
        %v1375 = vld [vmem:[#allocation2 + $0x3e] sm:$0xff]
        %v1376 = vld [vmem:[#allocation2 + $0x4e] sm:$0xff]
        %v1377 = vld [vmem:[#allocation2 + $0x56] sm:$0xff]
        %v1378 = vld [vmem:[#allocation2 + $0x66] sm:$0xff]
        %v1379 = vld [vmem:[#allocation2 + $0x6e] sm:$0xff]
        %v1380 = vld [vmem:[#allocation2 + $0x7e] sm:$0xff]
        %v1381 = vld [vmem:[#allocation2 + $0x86] sm:$0xff]
        %v1382 = vld [vmem:[#allocation2 + $0x96] sm:$0xff]
        %v1383 = vld [vmem:[#allocation2 + $0x9e] sm:$0xff]
        %v1384 = vld [vmem:[#allocation2 + $0xae] sm:$0xff]
        %v1385 = vld [vmem:[#allocation2 + $0xb6] sm:$0xff]
        %v1386 = vpack.c.bf16 %v1371, %v1370
        %v1387 = vpack.c.bf16 %v1373, %v1372
        %v1388 = vpack.c.bf16 %v1375, %v1374
        %v1389 = vpack.c.bf16 %v1377, %v1376
        %v1390 = vpack.c.bf16 %v1379, %v1378
        %v1391 = vpack.c.bf16 %v1381, %v1380
        %v1392 = vpack.c.bf16 %v1383, %v1382
        %v1393 = vpack.c.bf16 %v1385, %v1384
        %v1394 = vld [vmem:[#allocation4] sm:$0xf]
        %v1395 = vld [vmem:[#allocation4 + $0x4] sm:$0xf]
        %v1396 = vld [vmem:[#allocation4 + $0x8] sm:$0xf]
        %v1397 = vld [vmem:[#allocation4 + $0xc] sm:$0xf]
        %v1398 = vld [vmem:[#allocation4 + $0x10] sm:$0xf]
        %v1399 = vld [vmem:[#allocation4 + $0x14] sm:$0xf]
        %v1400 = vld [vmem:[#allocation4 + $0x18] sm:$0xf]
        %v1401 = vld [vmem:[#allocation4 + $0x1c] sm:$0xf]
        %v1402 = vld [vmem:[#allocation4 + $0x20] sm:$0xf]
        %v1403 = vld [vmem:[#allocation4 + $0x24] sm:$0xf]
        %v1404 = vld [vmem:[#allocation4 + $0x28] sm:$0xf]
        %v1405 = vld [vmem:[#allocation4 + $0x2c] sm:$0xf]
        %v1406 = vld [vmem:[#allocation4 + $0x30] sm:$0xf]
        %v1407 = vld [vmem:[#allocation4 + $0x34] sm:$0xf]
        %v1408 = vld [vmem:[#allocation4 + $0x38] sm:$0xf]
        %v1409 = vld [vmem:[#allocation4 + $0x3c] sm:$0xf]
        %v1410 = vld [vmem:[#allocation4 + $0x40] sm:$0xf]
        %v1411 = vld [vmem:[#allocation4 + $0x44] sm:$0xf]
        %v1412 = vld [vmem:[#allocation4 + $0x48] sm:$0xf]
        %v1413 = vld [vmem:[#allocation4 + $0x4c] sm:$0xf]
        %v1414 = vld [vmem:[#allocation4 + $0x50] sm:$0xf]
        %v1415 = vld [vmem:[#allocation4 + $0x54] sm:$0xf]
        %v1416 = vld [vmem:[#allocation4 + $0x58] sm:$0xf]
        %v1417 = vld [vmem:[#allocation4 + $0x5c] sm:$0xf]
        %v1418 = vld [vmem:[#allocation4 + $0x60] sm:$0xf]
        %v1419 = vld [vmem:[#allocation4 + $0x64] sm:$0xf]
        %v1420 = vld [vmem:[#allocation4 + $0x68] sm:$0xf]
        %v1421 = vld [vmem:[#allocation4 + $0x6c] sm:$0xf]
        %v1422 = vld [vmem:[#allocation4 + $0x70] sm:$0xf]
        %v1423 = vld [vmem:[#allocation4 + $0x74] sm:$0xf]
        %v1424 = vld [vmem:[#allocation4 + $0x78] sm:$0xf]
        %v1425 = vld [vmem:[#allocation4 + $0x7c] sm:$0xf]
        %v1426 = vld [vmem:[%s8] sm:$0x1]
        %v1428 = vlaneseq
        %v1429 = vshrl.u32 %v1428, 7
        %v1430 = vsub.s32 0, %v1429
        %v1431 = vrot.slane %v1426, %v1430
        %v1465 = vunpack.c.l.b16 %v1394
        %v1466 = vunpack.c.l.b16 %v1395
        %v1467 = vunpack.c.l.b16 %v1396
        %v1468 = vunpack.c.l.b16 %v1397
        %v1469 = vunpack.c.l.b16 %v1398
        %v1470 = vunpack.c.l.b16 %v1399
        %v1471 = vunpack.c.l.b16 %v1400
        %v1472 = vunpack.c.l.b16 %v1401
        %v1473 = vunpack.c.l.b16 %v1402
        %v1474 = vunpack.c.l.b16 %v1403
        %v1475 = vunpack.c.l.b16 %v1404
        %v1476 = vunpack.c.l.b16 %v1405
        %v1477 = vunpack.c.l.b16 %v1406
        %v1478 = vunpack.c.l.b16 %v1407
        %v1479 = vunpack.c.l.b16 %v1408
        %v1480 = vunpack.c.l.b16 %v1409
        %v1481 = vunpack.c.l.b16 %v1410
        %v1482 = vunpack.c.l.b16 %v1411
        %v1483 = vunpack.c.l.b16 %v1412
        %v1484 = vunpack.c.l.b16 %v1413
        %v1485 = vunpack.c.l.b16 %v1414
        %v1486 = vunpack.c.l.b16 %v1415
        %v1487 = vunpack.c.l.b16 %v1416
        %v1488 = vunpack.c.l.b16 %v1417
        %v1489 = vunpack.c.l.b16 %v1418
        %v1490 = vunpack.c.l.b16 %v1419
        %v1491 = vunpack.c.l.b16 %v1420
        %v1492 = vunpack.c.l.b16 %v1421
        %v1493 = vunpack.c.l.b16 %v1422
        %v1494 = vunpack.c.l.b16 %v1423
        %v1495 = vunpack.c.l.b16 %v1424
        %v1496 = vunpack.c.l.b16 %v1425
        %v1497 = vpack.c.b16 %v1466, %v1465
        %v1498 = vpack.c.b16 %v1468, %v1467
        %v1499 = vpack.c.b16 %v1470, %v1469
        %v1500 = vpack.c.b16 %v1472, %v1471
        %v1501 = vpack.c.b16 %v1474, %v1473
        %v1502 = vpack.c.b16 %v1476, %v1475
        %v1503 = vpack.c.b16 %v1478, %v1477
        %v1504 = vpack.c.b16 %v1480, %v1479
        %v1505 = vpack.c.b16 %v1482, %v1481
        %v1506 = vpack.c.b16 %v1484, %v1483
        %v1507 = vpack.c.b16 %v1486, %v1485
        %v1508 = vpack.c.b16 %v1488, %v1487
        %v1509 = vpack.c.b16 %v1490, %v1489
        %v1510 = vpack.c.b16 %v1492, %v1491
        %v1511 = vpack.c.b16 %v1494, %v1493
        %v1512 = vpack.c.b16 %v1496, %v1495
        %1529 = vmatprep.subr.bf16.mxu0 0
        %1530 = vmatpush1.bf16.msra.mxu0 %v1504
        %1531 = vmatprep.subr.bf16.mxu0 0
        %1532 = vmatpush1.bf16.msra.mxu0 %v1503
        %1533 = vmatprep.subr.bf16.mxu0 0
        %1534 = vmatpush1.bf16.msra.mxu0 %v1502
        %1535 = vmatprep.subr.bf16.mxu0 0
        %1536 = vmatpush1.bf16.msra.mxu0 %v1501
        %1537 = vmatprep.subr.bf16.mxu0 0
        %1538 = vmatpush1.bf16.msra.mxu0 %v1500
        %1539 = vmatprep.subr.bf16.mxu0 0
        %1540 = vmatpush1.bf16.msra.mxu0 %v1499
        %1541 = vmatprep.subr.bf16.mxu0 0
        %1542 = vmatpush1.bf16.msra.mxu0 %v1498
        %1543 = vmatprep.subr.bf16.mxu0 0
        %1544 = vmatpush1.bf16.msra.mxu0 %v1497
        %1545 = vmatprep.subr.bf16.mxu0 0
        %1546 = vmatpush2.bf16.msra.mxu0 %v1512
        %1547 = vmatprep.subr.bf16.mxu0 0
        %1548 = vmatpush2.bf16.msra.mxu0 %v1511
        %1549 = vmatprep.subr.bf16.mxu0 0
        %1550 = vmatpush2.bf16.msra.mxu0 %v1510
        %1551 = vmatprep.subr.bf16.mxu0 0
        %1552 = vmatpush2.bf16.msra.mxu0 %v1509
        %1553 = vmatprep.subr.bf16.mxu0 0
        %1554 = vmatpush2.bf16.msra.mxu0 %v1508
        %1555 = vmatprep.subr.bf16.mxu0 0
        %1556 = vmatpush2.bf16.msra.mxu0 %v1507
        %1557 = vmatprep.subr.bf16.mxu0 0
        %1558 = vmatpush2.bf16.msra.mxu0 %v1506
        %1559 = vmatprep.subr.bf16.mxu0 0
        %1560 = vmatpush2.bf16.msra.mxu0 %v1505
        %1561 = vmatprep.mubr.bf16.mxu0 %v1362
        %1562 = vmatmul.mubr.bf16.gmra.mxu0 %v1386
        %v1563 = vpop.f32.mrf.mxu0
        %v1564 = vadd.f32 %v1431, %v1563
        %v1565 = vpop.f32.mrf.mxu0
        %v1566 = vpop.f32.mrf.mxu0
        %v1567 = vadd.f32 %v1431, %v1566
        %v1568 = vpop.f32.mrf.mxu0
        %1569 = vmatprep.mubr.bf16.mxu0 %v1363
        %1570 = vmatmul.mubr.bf16.gmra.mxu0 %v1387
        %v1571 = vpop.f32.mrf.mxu0
        %v1572 = vadd.f32 %v1431, %v1571
        %v1573 = vpop.f32.mrf.mxu0
        %v1574 = vpop.f32.mrf.mxu0
        %v1575 = vadd.f32 %v1431, %v1574
        %v1576 = vpop.f32.mrf.mxu0
        %1577 = vmatprep.mubr.bf16.mxu0 %v1364
        %1578 = vmatmul.mubr.bf16.gmra.mxu0 %v1388
        %v1579 = vpop.f32.mrf.mxu0
        %v1580 = vadd.f32 %v1431, %v1579
        %v1581 = vpop.f32.mrf.mxu0
        %v1582 = vpop.f32.mrf.mxu0
        %v1583 = vadd.f32 %v1431, %v1582
        %v1584 = vpop.f32.mrf.mxu0
        %1585 = vmatprep.mubr.bf16.mxu0 %v1365
        %1586 = vmatmul.mubr.bf16.gmra.mxu0 %v1389
        %v1587 = vpop.f32.mrf.mxu0
        %v1588 = vadd.f32 %v1431, %v1587
        %v1589 = vpop.f32.mrf.mxu0
        %v1590 = vpop.f32.mrf.mxu0
        %v1591 = vadd.f32 %v1431, %v1590
        %v1592 = vpop.f32.mrf.mxu0
        %1593 = vmatprep.mubr.bf16.mxu0 %v1366
        %1594 = vmatmul.mubr.bf16.gmra.mxu0 %v1390
        %v1595 = vpop.f32.mrf.mxu0
        %v1596 = vadd.f32 %v1431, %v1595
        %v1597 = vpop.f32.mrf.mxu0
        %v1598 = vpop.f32.mrf.mxu0
        %v1599 = vadd.f32 %v1431, %v1598
        %v1600 = vpop.f32.mrf.mxu0
        %1601 = vmatprep.mubr.bf16.mxu0 %v1367
        %1602 = vmatmul.mubr.bf16.gmra.mxu0 %v1391
        %v1603 = vpop.f32.mrf.mxu0
        %v1604 = vadd.f32 %v1431, %v1603
        %v1605 = vpop.f32.mrf.mxu0
        %v1606 = vpop.f32.mrf.mxu0
        %v1607 = vadd.f32 %v1431, %v1606
        %v1608 = vpop.f32.mrf.mxu0
        %1609 = vmatprep.mubr.bf16.mxu0 %v1368
        %1610 = vmatmul.mubr.bf16.gmra.mxu0 %v1392
        %v1611 = vpop.f32.mrf.mxu0
        %v1612 = vadd.f32 %v1431, %v1611
        %v1613 = vpop.f32.mrf.mxu0
        %v1614 = vpop.f32.mrf.mxu0
        %v1615 = vadd.f32 %v1431, %v1614
        %v1616 = vpop.f32.mrf.mxu0
        %1617 = vmatprep.mubr.bf16.mxu0 %v1369
        %1618 = vmatmul.mubr.bf16.gmra.mxu0 %v1393
        %v1619 = vpop.f32.mrf.mxu0
        %v1620 = vadd.f32 %v1431, %v1619
        %v1621 = vpop.f32.mrf.mxu0
        %v1622 = vpop.f32.mrf.mxu0
        %v1623 = vadd.f32 %v1431, %v1622
        %v1624 = vpop.f32.mrf.mxu0
        %1625 = vdwg.mxu0
        %v1626 = vmax.f32 %v1564, 0.0
        %v1627 = vmax.f32 %v1567, 0.0
        %v1628 = vmax.f32 %v1572, 0.0
        %v1629 = vmax.f32 %v1575, 0.0
        %v1630 = vmax.f32 %v1580, 0.0
        %v1631 = vmax.f32 %v1583, 0.0
        %v1632 = vmax.f32 %v1588, 0.0
        %v1633 = vmax.f32 %v1591, 0.0
        %v1634 = vmax.f32 %v1596, 0.0
        %v1635 = vmax.f32 %v1599, 0.0
        %v1636 = vmax.f32 %v1604, 0.0
        %v1637 = vmax.f32 %v1607, 0.0
        %v1638 = vmax.f32 %v1612, 0.0
        %v1639 = vmax.f32 %v1615, 0.0
        %v1640 = vmax.f32 %v1620, 0.0
        %v1641 = vmax.f32 %v1623, 0.0
        %1642 = vst [vmem:[#allocation3 + $0x8] sm:$0xff] %v1626
        %1643 = vst [vmem:[#allocation3 + $0x10] sm:$0xff] %v1627
        %1644 = vst [vmem:[#allocation3 + $0x20] sm:$0xff] %v1628
        %1645 = vst [vmem:[#allocation3 + $0x28] sm:$0xff] %v1629
        %1646 = vst [vmem:[#allocation3 + $0x38] sm:$0xff] %v1630
        %1647 = vst [vmem:[#allocation3 + $0x40] sm:$0xff] %v1631
        %1648 = vst [vmem:[#allocation3 + $0x50] sm:$0xff] %v1632
        %1649 = vst [vmem:[#allocation3 + $0x58] sm:$0xff] %v1633
        %1650 = vst [vmem:[#allocation3 + $0x68] sm:$0xff] %v1634
        %1651 = vst [vmem:[#allocation3 + $0x70] sm:$0xff] %v1635
        %1652 = vst [vmem:[#allocation3 + $0x80] sm:$0xff] %v1636
        %1653 = vst [vmem:[#allocation3 + $0x88] sm:$0xff] %v1637
        %1654 = vst [vmem:[#allocation3 + $0x98] sm:$0xff] %v1638
        %1655 = vst [vmem:[#allocation3 + $0xa0] sm:$0xff] %v1639
        %1656 = vst [vmem:[#allocation3 + $0xb0] sm:$0xff] %v1640
        %1657 = vst [vmem:[#allocation3 + $0xb8] sm:$0xff] %v1641
        %v1658 = vpack.c.bf16 %v1627, %v1626
        %v1659 = vpack.c.bf16 %v1629, %v1628
        %v1660 = vpack.c.bf16 %v1631, %v1630
        %v1661 = vpack.c.bf16 %v1633, %v1632
        %v1662 = vpack.c.bf16 %v1635, %v1634
        %v1663 = vpack.c.bf16 %v1637, %v1636
        %v1664 = vpack.c.bf16 %v1639, %v1638
        %v1665 = vpack.c.bf16 %v1641, %v1640
        %v1666 = vld [vmem:[#allocation3 + $0x6] sm:$0xff]
        %v1667 = vld [vmem:[#allocation3 + $0xe] sm:$0xff]
        %v1668 = vld [vmem:[#allocation3 + $0x1e] sm:$0xff]
        %v1669 = vld [vmem:[#allocation3 + $0x26] sm:$0xff]
        %v1670 = vld [vmem:[#allocation3 + $0x36] sm:$0xff]
        %v1671 = vld [vmem:[#allocation3 + $0x3e] sm:$0xff]
        %v1672 = vld [vmem:[#allocation3 + $0x4e] sm:$0xff]
        %v1673 = vld [vmem:[#allocation3 + $0x56] sm:$0xff]
        %v1674 = vld [vmem:[#allocation3 + $0x66] sm:$0xff]
        %v1675 = vld [vmem:[#allocation3 + $0x6e] sm:$0xff]
        %v1676 = vld [vmem:[#allocation3 + $0x7e] sm:$0xff]
        %v1677 = vld [vmem:[#allocation3 + $0x86] sm:$0xff]
        %v1678 = vld [vmem:[#allocation3 + $0x96] sm:$0xff]
        %v1679 = vld [vmem:[#allocation3 + $0x9e] sm:$0xff]
        %v1680 = vld [vmem:[#allocation3 + $0xae] sm:$0xff]
        %v1681 = vld [vmem:[#allocation3 + $0xb6] sm:$0xff]
        %v1682 = vpack.c.bf16 %v1667, %v1666
        %v1683 = vpack.c.bf16 %v1669, %v1668
        %v1684 = vpack.c.bf16 %v1671, %v1670
        %v1685 = vpack.c.bf16 %v1673, %v1672
        %v1686 = vpack.c.bf16 %v1675, %v1674
        %v1687 = vpack.c.bf16 %v1677, %v1676
        %v1688 = vpack.c.bf16 %v1679, %v1678
        %v1689 = vpack.c.bf16 %v1681, %v1680
        %v1690 = vld [vmem:[#allocation7] sm:$0xf]
        %v1691 = vld [vmem:[#allocation7 + $0x4] sm:$0xf]
        %v1692 = vld [vmem:[#allocation7 + $0x8] sm:$0xf]
        %v1693 = vld [vmem:[#allocation7 + $0xc] sm:$0xf]
        %v1694 = vld [vmem:[#allocation7 + $0x10] sm:$0xf]
        %v1695 = vld [vmem:[#allocation7 + $0x14] sm:$0xf]
        %v1696 = vld [vmem:[#allocation7 + $0x18] sm:$0xf]
        %v1697 = vld [vmem:[#allocation7 + $0x1c] sm:$0xf]
        %v1698 = vld [vmem:[#allocation7 + $0x20] sm:$0xf]
        %v1699 = vld [vmem:[#allocation7 + $0x24] sm:$0xf]
        %v1700 = vld [vmem:[#allocation7 + $0x28] sm:$0xf]
        %v1701 = vld [vmem:[#allocation7 + $0x2c] sm:$0xf]
        %v1702 = vld [vmem:[#allocation7 + $0x30] sm:$0xf]
        %v1703 = vld [vmem:[#allocation7 + $0x34] sm:$0xf]
        %v1704 = vld [vmem:[#allocation7 + $0x38] sm:$0xf]
        %v1705 = vld [vmem:[#allocation7 + $0x3c] sm:$0xf]
        %v1706 = vld [vmem:[#allocation7 + $0x40] sm:$0xf]
        %v1707 = vld [vmem:[#allocation7 + $0x44] sm:$0xf]
        %v1708 = vld [vmem:[#allocation7 + $0x48] sm:$0xf]
        %v1709 = vld [vmem:[#allocation7 + $0x4c] sm:$0xf]
        %v1710 = vld [vmem:[#allocation7 + $0x50] sm:$0xf]
        %v1711 = vld [vmem:[#allocation7 + $0x54] sm:$0xf]
        %v1712 = vld [vmem:[#allocation7 + $0x58] sm:$0xf]
        %v1713 = vld [vmem:[#allocation7 + $0x5c] sm:$0xf]
        %v1714 = vld [vmem:[#allocation7 + $0x60] sm:$0xf]
        %v1715 = vld [vmem:[#allocation7 + $0x64] sm:$0xf]
        %v1716 = vld [vmem:[#allocation7 + $0x68] sm:$0xf]
        %v1717 = vld [vmem:[#allocation7 + $0x6c] sm:$0xf]
        %v1718 = vld [vmem:[#allocation7 + $0x70] sm:$0xf]
        %v1719 = vld [vmem:[#allocation7 + $0x74] sm:$0xf]
        %v1720 = vld [vmem:[#allocation7 + $0x78] sm:$0xf]
        %v1721 = vld [vmem:[#allocation7 + $0x7c] sm:$0xf]
        %v1722 = vld [vmem:[%s10] sm:$0x1]
        %v1724 = vlaneseq
        %v1725 = vshrl.u32 %v1724, 7
        %v1726 = vsub.s32 0, %v1725
        %v1727 = vrot.slane %v1722, %v1726
        %v1761 = vunpack.c.l.b16 %v1690
        %v1762 = vunpack.c.l.b16 %v1691
        %v1763 = vunpack.c.l.b16 %v1692
        %v1764 = vunpack.c.l.b16 %v1693
        %v1765 = vunpack.c.l.b16 %v1694
        %v1766 = vunpack.c.l.b16 %v1695
        %v1767 = vunpack.c.l.b16 %v1696
        %v1768 = vunpack.c.l.b16 %v1697
        %v1769 = vunpack.c.l.b16 %v1698
        %v1770 = vunpack.c.l.b16 %v1699
        %v1771 = vunpack.c.l.b16 %v1700
        %v1772 = vunpack.c.l.b16 %v1701
        %v1773 = vunpack.c.l.b16 %v1702
        %v1774 = vunpack.c.l.b16 %v1703
        %v1775 = vunpack.c.l.b16 %v1704
        %v1776 = vunpack.c.l.b16 %v1705
        %v1777 = vunpack.c.l.b16 %v1706
        %v1778 = vunpack.c.l.b16 %v1707
        %v1779 = vunpack.c.l.b16 %v1708
        %v1780 = vunpack.c.l.b16 %v1709
        %v1781 = vunpack.c.l.b16 %v1710
        %v1782 = vunpack.c.l.b16 %v1711
        %v1783 = vunpack.c.l.b16 %v1712
        %v1784 = vunpack.c.l.b16 %v1713
        %v1785 = vunpack.c.l.b16 %v1714
        %v1786 = vunpack.c.l.b16 %v1715
        %v1787 = vunpack.c.l.b16 %v1716
        %v1788 = vunpack.c.l.b16 %v1717
        %v1789 = vunpack.c.l.b16 %v1718
        %v1790 = vunpack.c.l.b16 %v1719
        %v1791 = vunpack.c.l.b16 %v1720
        %v1792 = vunpack.c.l.b16 %v1721
        %v1793 = vpack.c.b16 %v1762, %v1761
        %v1794 = vpack.c.b16 %v1764, %v1763
        %v1795 = vpack.c.b16 %v1766, %v1765
        %v1796 = vpack.c.b16 %v1768, %v1767
        %v1797 = vpack.c.b16 %v1770, %v1769
        %v1798 = vpack.c.b16 %v1772, %v1771
        %v1799 = vpack.c.b16 %v1774, %v1773
        %v1800 = vpack.c.b16 %v1776, %v1775
        %v1801 = vpack.c.b16 %v1778, %v1777
        %v1802 = vpack.c.b16 %v1780, %v1779
        %v1803 = vpack.c.b16 %v1782, %v1781
        %v1804 = vpack.c.b16 %v1784, %v1783
        %v1805 = vpack.c.b16 %v1786, %v1785
        %v1806 = vpack.c.b16 %v1788, %v1787
        %v1807 = vpack.c.b16 %v1790, %v1789
        %v1808 = vpack.c.b16 %v1792, %v1791
        %1825 = vmatprep.subr.bf16.mxu0 0
        %1826 = vmatpush1.bf16.msra.mxu0 %v1800
        %1827 = vmatprep.subr.bf16.mxu0 0
        %1828 = vmatpush1.bf16.msra.mxu0 %v1799
        %1829 = vmatprep.subr.bf16.mxu0 0
        %1830 = vmatpush1.bf16.msra.mxu0 %v1798
        %1831 = vmatprep.subr.bf16.mxu0 0
        %1832 = vmatpush1.bf16.msra.mxu0 %v1797
        %1833 = vmatprep.subr.bf16.mxu0 0
        %1834 = vmatpush1.bf16.msra.mxu0 %v1796
        %1835 = vmatprep.subr.bf16.mxu0 0
        %1836 = vmatpush1.bf16.msra.mxu0 %v1795
        %1837 = vmatprep.subr.bf16.mxu0 0
        %1838 = vmatpush1.bf16.msra.mxu0 %v1794
        %1839 = vmatprep.subr.bf16.mxu0 0
        %1840 = vmatpush1.bf16.msra.mxu0 %v1793
        %1841 = vmatprep.subr.bf16.mxu0 0
        %1842 = vmatpush2.bf16.msra.mxu0 %v1808
        %1843 = vmatprep.subr.bf16.mxu0 0
        %1844 = vmatpush2.bf16.msra.mxu0 %v1807
        %1845 = vmatprep.subr.bf16.mxu0 0
        %1846 = vmatpush2.bf16.msra.mxu0 %v1806
        %1847 = vmatprep.subr.bf16.mxu0 0
        %1848 = vmatpush2.bf16.msra.mxu0 %v1805
        %1849 = vmatprep.subr.bf16.mxu0 0
        %1850 = vmatpush2.bf16.msra.mxu0 %v1804
        %1851 = vmatprep.subr.bf16.mxu0 0
        %1852 = vmatpush2.bf16.msra.mxu0 %v1803
        %1853 = vmatprep.subr.bf16.mxu0 0
        %1854 = vmatpush2.bf16.msra.mxu0 %v1802
        %1855 = vmatprep.subr.bf16.mxu0 0
        %1856 = vmatpush2.bf16.msra.mxu0 %v1801
        %1857 = vmatprep.mubr.bf16.mxu0 %v1658
        %1858 = vmatmul.mubr.bf16.gmra.mxu0 %v1682
        %v1859 = vpop.f32.mrf.mxu0
        %v1860 = vadd.f32 %v1727, %v1859
        %v1861 = vpop.f32.mrf.mxu0
        %v1862 = vpop.f32.mrf.mxu0
        %v1863 = vadd.f32 %v1727, %v1862
        %v1864 = vpop.f32.mrf.mxu0
        %1865 = vmatprep.mubr.bf16.mxu0 %v1659
        %1866 = vmatmul.mubr.bf16.gmra.mxu0 %v1683
        %v1867 = vpop.f32.mrf.mxu0
        %v1868 = vadd.f32 %v1727, %v1867
        %v1869 = vpop.f32.mrf.mxu0
        %v1870 = vpop.f32.mrf.mxu0
        %v1871 = vadd.f32 %v1727, %v1870
        %v1872 = vpop.f32.mrf.mxu0
        %1873 = vmatprep.mubr.bf16.mxu0 %v1660
        %1874 = vmatmul.mubr.bf16.gmra.mxu0 %v1684
        %v1875 = vpop.f32.mrf.mxu0
        %v1876 = vadd.f32 %v1727, %v1875
        %v1877 = vpop.f32.mrf.mxu0
        %v1878 = vpop.f32.mrf.mxu0
        %v1879 = vadd.f32 %v1727, %v1878
        %v1880 = vpop.f32.mrf.mxu0
        %1881 = vmatprep.mubr.bf16.mxu0 %v1661
        %1882 = vmatmul.mubr.bf16.gmra.mxu0 %v1685
        %v1883 = vpop.f32.mrf.mxu0
        %v1884 = vadd.f32 %v1727, %v1883
        %v1885 = vpop.f32.mrf.mxu0
        %v1886 = vpop.f32.mrf.mxu0
        %v1887 = vadd.f32 %v1727, %v1886
        %v1888 = vpop.f32.mrf.mxu0
        %1889 = vmatprep.mubr.bf16.mxu0 %v1662
        %1890 = vmatmul.mubr.bf16.gmra.mxu0 %v1686
        %v1891 = vpop.f32.mrf.mxu0
        %v1892 = vadd.f32 %v1727, %v1891
        %v1893 = vpop.f32.mrf.mxu0
        %v1894 = vpop.f32.mrf.mxu0
        %v1895 = vadd.f32 %v1727, %v1894
        %v1896 = vpop.f32.mrf.mxu0
        %1897 = vmatprep.mubr.bf16.mxu0 %v1663
        %1898 = vmatmul.mubr.bf16.gmra.mxu0 %v1687
        %v1899 = vpop.f32.mrf.mxu0
        %v1900 = vadd.f32 %v1727, %v1899
        %v1901 = vpop.f32.mrf.mxu0
        %v1902 = vpop.f32.mrf.mxu0
        %v1903 = vadd.f32 %v1727, %v1902
        %v1904 = vpop.f32.mrf.mxu0
        %1905 = vmatprep.mubr.bf16.mxu0 %v1664
        %1906 = vmatmul.mubr.bf16.gmra.mxu0 %v1688
        %v1907 = vpop.f32.mrf.mxu0
        %v1908 = vadd.f32 %v1727, %v1907
        %v1909 = vpop.f32.mrf.mxu0
        %v1910 = vpop.f32.mrf.mxu0
        %v1911 = vadd.f32 %v1727, %v1910
        %v1912 = vpop.f32.mrf.mxu0
        %1913 = vmatprep.mubr.bf16.mxu0 %v1665
        %1914 = vmatmul.mubr.bf16.gmra.mxu0 %v1689
        %v1915 = vpop.f32.mrf.mxu0
        %v1916 = vadd.f32 %v1727, %v1915
        %v1917 = vpop.f32.mrf.mxu0
        %v1918 = vpop.f32.mrf.mxu0
        %v1919 = vadd.f32 %v1727, %v1918
        %v1920 = vpop.f32.mrf.mxu0
        %1921 = vdwg.mxu0
        %v1922 = vmax.f32 %v1860, 0.0
        %v1923 = vmax.f32 %v1863, 0.0
        %v1924 = vmax.f32 %v1868, 0.0
        %v1925 = vmax.f32 %v1871, 0.0
        %v1926 = vmax.f32 %v1876, 0.0
        %v1927 = vmax.f32 %v1879, 0.0
        %v1928 = vmax.f32 %v1884, 0.0
        %v1929 = vmax.f32 %v1887, 0.0
        %v1930 = vmax.f32 %v1892, 0.0
        %v1931 = vmax.f32 %v1895, 0.0
        %v1932 = vmax.f32 %v1900, 0.0
        %v1933 = vmax.f32 %v1903, 0.0
        %v1934 = vmax.f32 %v1908, 0.0
        %v1935 = vmax.f32 %v1911, 0.0
        %v1936 = vmax.f32 %v1916, 0.0
        %v1937 = vmax.f32 %v1919, 0.0
        %v1938 = vadd.f32 %v1922, %v1330
        %v1939 = vadd.f32 %v1923, %v1331
        %v1940 = vadd.f32 %v1924, %v1332
        %v1941 = vadd.f32 %v1925, %v1333
        %v1942 = vadd.f32 %v1926, %v1334
        %v1943 = vadd.f32 %v1927, %v1335
        %v1944 = vadd.f32 %v1928, %v1336
        %v1945 = vadd.f32 %v1929, %v1337
        %v1946 = vadd.f32 %v1930, %v1338
        %v1947 = vadd.f32 %v1931, %v1339
        %v1948 = vadd.f32 %v1932, %v1340
        %v1949 = vadd.f32 %v1933, %v1341
        %v1950 = vadd.f32 %v1934, %v1342
        %v1951 = vadd.f32 %v1935, %v1343
        %v1952 = vadd.f32 %v1936, %v1344
        %v1953 = vadd.f32 %v1937, %v1345
        %v1954 = vmax.f32 %v1938, 0.0
        %v1955 = vmax.f32 %v1939, 0.0
        %v1956 = vmax.f32 %v1940, 0.0
        %v1957 = vmax.f32 %v1941, 0.0
        %v1958 = vmax.f32 %v1942, 0.0
        %v1959 = vmax.f32 %v1943, 0.0
        %v1960 = vmax.f32 %v1944, 0.0
        %v1961 = vmax.f32 %v1945, 0.0
        %v1962 = vmax.f32 %v1946, 0.0
        %v1963 = vmax.f32 %v1947, 0.0
        %v1964 = vmax.f32 %v1948, 0.0
        %v1965 = vmax.f32 %v1949, 0.0
        %v1966 = vmax.f32 %v1950, 0.0
        %v1967 = vmax.f32 %v1951, 0.0
        %v1968 = vmax.f32 %v1952, 0.0
        %v1969 = vmax.f32 %v1953, 0.0
        %v1970 = vlaneseq
        %v1971 = vand.u32 %v1970, 127
        %v1972 = vlaneseq
        %v1973 = vshrl.u32 %v1972, 7
        %v1974 = vmul.u32 %v1973, 16
        %v1975 = vadd.s32 %v1974, 15
        %vm1976 = vcmp.eq.s32.totalorder %v1971, %v1975
        %v1977 = vsel %vm1976, 1, 0
        %v1978 = vcvt.s32.f32 %v1977
        %v1979 = vpack.c.bf16 %v1978, %v1978
        %v1980 = vpack.c.bf16 %v1955, %v1954
        %v1981 = vpack.c.bf16 %v1957, %v1956
        %v1982 = vpack.c.bf16 %v1959, %v1958
        %v1983 = vpack.c.bf16 %v1961, %v1960
        %v1984 = vpack.c.bf16 %v1963, %v1962
        %v1985 = vpack.c.bf16 %v1965, %v1964
        %v1986 = vpack.c.bf16 %v1967, %v1966
        %v1987 = vpack.c.bf16 %v1969, %v1968
        %1988 = vmatprep.subr.bf16.mxu0 0
        %1989 = vmatpush1.bf16.msra.mxu0 %v1987
        %1990 = vmatprep.subr.bf16.mxu0 0
        %1991 = vmatpush1.bf16.msra.mxu0 %v1986
        %1992 = vmatprep.subr.bf16.mxu0 0
        %1993 = vmatpush1.bf16.msra.mxu0 %v1985
        %1994 = vmatprep.subr.bf16.mxu0 0
        %1995 = vmatpush1.bf16.msra.mxu0 %v1984
        %1996 = vmatprep.subr.bf16.mxu0 0
        %1997 = vmatpush1.bf16.msra.mxu0 %v1983
        %1998 = vmatprep.subr.bf16.mxu0 0
        %1999 = vmatpush1.bf16.msra.mxu0 %v1982
        %2000 = vmatprep.subr.bf16.mxu0 0
        %2001 = vmatpush1.bf16.msra.mxu0 %v1981
        %2002 = vmatprep.subr.bf16.mxu0 0
        %2003 = vmatpush1.bf16.msra.mxu0 %v1980
        %2004 = vmatprep.subr.bf16.mxu0 0
        %2005 = vmatpush2.bf16.msra.mxu0 0
        %2006 = vmatprep.subr.bf16.mxu0 0
        %2007 = vmatpush2.bf16.msra.mxu0 0
        %2008 = vmatprep.subr.bf16.mxu0 0
        %2009 = vmatpush2.bf16.msra.mxu0 0
        %2010 = vmatprep.subr.bf16.mxu0 0
        %2011 = vmatpush2.bf16.msra.mxu0 0
        %2012 = vmatprep.subr.bf16.mxu0 0
        %2013 = vmatpush2.bf16.msra.mxu0 0
        %2014 = vmatprep.subr.bf16.mxu0 0
        %2015 = vmatpush2.bf16.msra.mxu0 0
        %2016 = vmatprep.subr.bf16.mxu0 0
        %2017 = vmatpush2.bf16.msra.mxu0 0
        %2018 = vmatprep.subr.bf16.mxu0 0
        %2019 = vmatpush2.bf16.msra.mxu0 0
        %2020 = vmatprep.mubr.bf16.mxu0 0
        %2021 = vmatmul.mubr.bf16.gmra.mxu0 %v1979
        %v2022 = vpop.f32.mrf.mxu0
        %v2023 = vadd.f32 0.0, %v2022
        %v2024 = vpop.f32.mrf.mxu0
        %v2025 = vpop.f32.mrf.mxu0
        %v2026 = vpop.f32.mrf.mxu0
        %2027 = vdwg.mxu0
        %v2028 = vpack.c.bf16 %v2023, %v2023
        %v2029 = vld [vmem:[#allocation9] sm:$0xf]
        %v2030 = vld [vmem:[#allocation9 + $0x4] sm:$0xf]
        %v2031 = vld [vmem:[#allocation9 + $0x8] sm:$0xf]
        %v2032 = vld [vmem:[#allocation9 + $0xc] sm:$0xf]
        %v2033 = vld [vmem:[#allocation9 + $0x10] sm:$0xf]
        %v2034 = vld [vmem:[#allocation9 + $0x14] sm:$0xf]
        %v2035 = vld [vmem:[#allocation9 + $0x18] sm:$0xf]
        %v2036 = vld [vmem:[#allocation9 + $0x1c] sm:$0xf]
        %v2037 = vld [vmem:[#allocation9 + $0x20] sm:$0xf]
        %v2038 = vld [vmem:[#allocation9 + $0x24] sm:$0xf]
        %v2039 = vld [vmem:[#allocation9 + $0x28] sm:$0xf]
        %v2040 = vld [vmem:[#allocation9 + $0x2c] sm:$0xf]
        %v2041 = vld [vmem:[#allocation9 + $0x30] sm:$0xf]
        %v2042 = vld [vmem:[#allocation9 + $0x34] sm:$0xf]
        %v2043 = vld [vmem:[#allocation9 + $0x38] sm:$0xf]
        %v2044 = vld [vmem:[#allocation9 + $0x3c] sm:$0xf]
        %v2045 = vld [vmem:[%s12] sm:$0x1]
        %v2047 = vlaneseq
        %v2048 = vshrl.u32 %v2047, 7
        %v2049 = vsub.s32 0, %v2048
        %v2050 = vrot.slane %v2045, %v2049
        %v2068 = vunpack.c.l.b16 %v2029
        %v2069 = vunpack.c.l.b16 %v2030
        %v2070 = vunpack.c.l.b16 %v2031
        %v2071 = vunpack.c.l.b16 %v2032
        %v2072 = vunpack.c.l.b16 %v2033
        %v2073 = vunpack.c.l.b16 %v2034
        %v2074 = vunpack.c.l.b16 %v2035
        %v2075 = vunpack.c.l.b16 %v2036
        %v2076 = vunpack.c.l.b16 %v2037
        %v2077 = vunpack.c.l.b16 %v2038
        %v2078 = vunpack.c.l.b16 %v2039
        %v2079 = vunpack.c.l.b16 %v2040
        %v2080 = vunpack.c.l.b16 %v2041
        %v2081 = vunpack.c.l.b16 %v2042
        %v2082 = vunpack.c.l.b16 %v2043
        %v2083 = vunpack.c.l.b16 %v2044
        %v2084 = vpack.c.b16 %v2069, %v2068
        %v2085 = vpack.c.b16 %v2071, %v2070
        %v2086 = vpack.c.b16 %v2073, %v2072
        %v2087 = vpack.c.b16 %v2075, %v2074
        %v2088 = vpack.c.b16 %v2077, %v2076
        %v2089 = vpack.c.b16 %v2079, %v2078
        %v2090 = vpack.c.b16 %v2081, %v2080
        %v2091 = vpack.c.b16 %v2083, %v2082
        %2100 = vmatprep.subr.bf16.mxu0 0
        %2101 = vmatpush1.bf16.msra.mxu0 %v2091
        %2102 = vmatprep.subr.bf16.mxu0 0
        %2103 = vmatpush1.bf16.msra.mxu0 %v2090
        %2104 = vmatprep.subr.bf16.mxu0 0
        %2105 = vmatpush1.bf16.msra.mxu0 %v2089
        %2106 = vmatprep.subr.bf16.mxu0 0
        %2107 = vmatpush1.bf16.msra.mxu0 %v2088
        %2108 = vmatprep.subr.bf16.mxu0 0
        %2109 = vmatpush1.bf16.msra.mxu0 %v2087
        %2110 = vmatprep.subr.bf16.mxu0 0
        %2111 = vmatpush1.bf16.msra.mxu0 %v2086
        %2112 = vmatprep.subr.bf16.mxu0 0
        %2113 = vmatpush1.bf16.msra.mxu0 %v2085
        %2114 = vmatprep.subr.bf16.mxu0 0
        %2115 = vmatpush1.bf16.msra.mxu0 %v2084
        %2116 = vmatprep.subr.bf16.mxu0 0
        %2117 = vmatpush2.bf16.msra.mxu0 0
        %2118 = vmatprep.subr.bf16.mxu0 0
        %2119 = vmatpush2.bf16.msra.mxu0 0
        %2120 = vmatprep.subr.bf16.mxu0 0
        %2121 = vmatpush2.bf16.msra.mxu0 0
        %2122 = vmatprep.subr.bf16.mxu0 0
        %2123 = vmatpush2.bf16.msra.mxu0 0
        %2124 = vmatprep.subr.bf16.mxu0 0
        %2125 = vmatpush2.bf16.msra.mxu0 0
        %2126 = vmatprep.subr.bf16.mxu0 0
        %2127 = vmatpush2.bf16.msra.mxu0 0
        %2128 = vmatprep.subr.bf16.mxu0 0
        %2129 = vmatpush2.bf16.msra.mxu0 0
        %2130 = vmatprep.subr.bf16.mxu0 0
        %2131 = vmatpush2.bf16.msra.mxu0 0
        %2132 = vmatprep.mubr.bf16.mxu0 0
        %2133 = vmatmul.mubr.bf16.gmra.mxu0 %v2028
        %v2134 = vpop.f32.mrf.mxu0
        %v2135 = vadd.f32 %v2050, %v2134
        %v2136 = vpop.f32.mrf.mxu0
        %v2137 = vpop.f32.mrf.mxu0
        %v2138 = vpop.f32.mrf.mxu0
        %2139 = vdwg.mxu0
        %vm2140 = vcmp.lt.s32.totalorder %v1971, 5
        %v2141 = vsel %vm2140, %v2135, -1e+30
        %2142 = vmax.xlane.f32.xlu0 %v2141
        %v2143 = vpop.xlane.xlu0 %2142
        %v2144 = vsub.f32 %v2141, %v2143
        %v2145 = vmul.f32 %v2144, 1.442695
        %v2146 = vpow.pop %v2145
        %2147 = vadd.xlane.f32.xlu0 %v2146
        %v2148 = vpop.xlane.xlu0 %2147
        %v2149 = vlog2.pop %v2148
        %v2150 = vmul.f32 %v2149, 0.6931472
        %v2151 = vsub.f32 %v2144, %v2150
        %2152 = vst [vmem:[%s480] sm:$0xff] %v2151
        %s2153 = sand.u32 %s315, 1
        %s2154 = scalar_lea.sflag [#allocation6], %s2153
        %s2155 = sand.u32 %s315, 1
        %s2156 = smul.addr %s2155, 8
        %s2157 = scalar_lea.vmem [#allocation10], %s2156
        // Predicated region
        $region85: #{tpu_custom_call.1} parent=71 // pred_check
          %p2158 = pneg %p325
        $region86: #{tpu_custom_call.1} parent=71 // pred_check_branch
          %2160 = sbr.rel (%p2158) target = $region88
        $region87: #{tpu_custom_call.1} parent=71 // pred_region
          %s2162 = ssub.s32 128, 128
          %2163 = vsyncadd %s2154, %s2162
          %s2164 = smul.addr %s29, 128
          %s2165 = scalar_lea.hbm %s13, %s2164
          %s2167 = sshll.u32 %s2157, 4
          %s2168 = int_to_ptr.vmem [resolvable:$true] %s2167
          %2170 = dma.vmem_to_hbm [thread:$0]  %s2168, 128, %s2165, %s2154
        $region88: #{tpu_custom_call.1} parent=71 // pred_fallthru
          _
      $region72: #{tpu_custom_call.1} parent=5 // pred_fallthru
        _
      %p2171 = scmp.le.s32.totalorder 2, %s24
      // Predicated region
      $region89: #{tpu_custom_call.1} parent=5 // pred_check
        %p2172 = pneg %p2171
      $region90: #{tpu_custom_call.1} parent=5 // pred_check_branch
        %2174 = sbr.rel (%p2172) target = $region92
      $region91: #{tpu_custom_call.1} parent=5 // pred_region
        %s2175 = ssub.s32 %s24, 2
        // Predicated region
        $region93: #{tpu_custom_call.1} parent=91 // pred_check
          %p2176 = pneg %p331
        $region94: #{tpu_custom_call.1} parent=91 // pred_check_branch
          %2178 = sbr.rel (%p2176) target = $region96
        $region95: #{tpu_custom_call.1} parent=91 // pred_region
          %s2179 = sand.u32 %s316, 1
          %s2180 = scalar_lea.sflag [#allocation6], %s2179
          %s2181 = sand.u32 %s316, 1
          %s2182 = smul.addr %s2181, 8
          %s2183 = scalar_lea.vmem [#allocation10], %s2182
          %2184 = dma.done %s2180, 128
        $region96: #{tpu_custom_call.1} parent=91 // pred_fallthru
          _
      $region92: #{tpu_custom_call.1} parent=5 // pred_fallthru
        _
    $region6: #{tpu_custom_call.1} parent=1 // loop_footer
      %s28 = sadd.s32 1, %s24
    $region7: #{tpu_custom_call.1} parent=1 // loop_footer_branch
      %23 = sbr.rel target = $region3
    $region8: #{tpu_custom_call.1} parent=1 // loop_exit
      _
    %2185 = vsyncpa [#allocation5], 1
    %s2186 = scalar_lea.sflag [#allocation5], 1
    %2187 = vsyncpa %s2186, 1
    %2188 = vsyncpa [#allocation8], 1
    %2189 = vsyncpa [#allocation6], 1
    %s2190 = scalar_lea.sflag [#allocation6], 1
    %2191 = vsyncpa %s2190, 1

</llo_original>
